<compile_context>
chip_gen: v7x
topology: tpu7x:2x2x1
jax: 0.10.0
libtpu: 0.0.40
codegen_flags: <defaults>
</compile_context>

<pallas_src>
import jax
import jax.numpy as jnp
from jax.experimental import pallas as pl
from jax.experimental.pallas import tpu as pltpu

# ---- sizes (small, consistent with the forward pass) ----
B = 8            # batch
S_DIM = 16       # state dim
A = 8            # action dim
H = 32           # hidden width (Q net and inference net)
N_SAMPLES = 4    # agent.n_action_samples
N_ITERS = 3      # n_inf_iters
SB = N_SAMPLES * B   # batched-sample rows per iteration

# ---- packed weight-slab layout (all row offsets multiples of 8, lanes = H = 32) ----
SLAB_LANES = H
R_WQ1S  = 0      # (S_DIM, H)  Q layer-1, state rows
R_WQ1A  = 16     # (A, H)      Q layer-1, action rows
R_WQ1AT = 24     # (H, A)      transpose of the action rows (cols 0..A-1), for backprop
R_MISC  = 56     # 8-row misc block: bq1 | wq2^T | bi1 | bi2 | bq2
R_WI1PG = 64     # (4A, H)     inference layer-1 rows for [mean|log_std|g_mean|g_log_std]
R_WI1S  = 96     # (S_DIM, H)  inference layer-1 rows for state
R_WI2   = 112    # (H, 2A)     inference layer-2 (cols 0..2A-1), packed [mean|log_std] update
SLAB_ROWS = 144


def _iterative_inference_kernel(w_ref, ml0_ref, state_ref, eps_ref,
                                ml_out_ref, obj_out_ref):
    ml = ml0_ref[...]                                     # (B, 2A) packed [mean | log_std]
    state = state_ref[...]                                # (B, S_DIM)

    # ---- one-time unpack of the single weight slab (static slices) ----
    misc = w_ref[R_MISC:R_MISC + 8, :]                    # (8, 32) aligned misc tile
    bq1 = misc[0:1, :]                                    # (1, H)
    wq2t = misc[1:2, :]                                   # (1, H)  Q output weight, row form
    bi1 = misc[2:3, :]                                    # (1, H)
    bi2 = misc[3:4, 0:2 * A]                              # (1, 2A)
    bq2 = misc[4:5, 0:1]                                  # (1, 1)  folded into obj after loop

    # bf16 MXU operands (cast once, hoisted); accumulation stays f32
    wq1a_bf = w_ref[R_WQ1A:R_WQ1A + A, :].astype(jnp.bfloat16)           # (A, H)
    wq1at_bf = w_ref[R_WQ1AT:R_WQ1AT + H, 0:A].astype(jnp.bfloat16)      # (H, A)
    wi1pg_bf = w_ref[R_WI1PG:R_WI1PG + 4 * A, :].astype(jnp.bfloat16)    # (4A, H)
    wi2_bf = w_ref[R_WI2:R_WI2 + H, 0:2 * A].astype(jnp.bfloat16)        # (H, 2A)

    # ---- loop-invariant hoists (computed once, f32) ----
    s_q_proj = jnp.dot(state, w_ref[R_WQ1S:R_WQ1S + S_DIM, :],
                       preferred_element_type=jnp.float32)               # (B, H)
    pre_base = jnp.tile(s_q_proj + bq1, (N_SAMPLES, 1))                  # (SB, H)
    base_inf = jnp.dot(state, w_ref[R_WI1S:R_WI1S + S_DIM, :],
                       preferred_element_type=jnp.float32) + bi1         # (B, H)
    wq2t_b = jnp.broadcast_to(wq2t, (SB, H))                             # (SB, H)
    neg_inv_s = jnp.float32(-1.0 / N_SAMPLES)

    q_sums = []
    for it in range(N_ITERS):
        mean = ml[:, :A]                                  # lane-slices within one vreg
        logstd = ml[:, A:]
        std = jnp.exp(logstd)                             # (B, A)  f32 EUP
        # TODO(synk): reference ApproxPost typically clamps log_std; unclamped here.
        eps = eps_ref[it]                                 # (SB, A) batched-sample slab

        # reparameterized actions for all samples at once (f32 VPU)
        actions = (jnp.tile(mean, (N_SAMPLES, 1))
                   + jnp.tile(std, (N_SAMPLES, 1)) * eps)                # (SB, A)

        # Q(state, action): 2-layer tanh MLP, batched over samples (one bf16 MXU pass)
        pre = pre_base + jnp.dot(actions.astype(jnp.bfloat16), wq1a_bf,
                                 preferred_element_type=jnp.float32)     # (SB, H)
        h = jnp.tanh(pre)
        qdot = jnp.sum(h * wq2t_b, axis=1, keepdims=True)                # (SB, 1), no bq2

        # manual backprop: dQ/da for all samples (one bf16 MXU pass)
        g_h = (1.0 - h * h) * wq2t_b                                     # (SB, H)
        g_a = jnp.dot(g_h.astype(jnp.bfloat16), wq1at_bf,
                      preferred_element_type=jnp.float32)                # (SB, A)

        # reduce over the sample axis (sublane-only reshapes)
        q_sum = jnp.sum(qdot.reshape(N_SAMPLES, B, 1), axis=0)           # (B, 1)
        ga_sum = jnp.sum(g_a.reshape(N_SAMPLES, B, A), axis=0)           # (B, A)
        gae_sum = jnp.sum((g_a * eps).reshape(N_SAMPLES, B, A), axis=0)  # (B, A)
        q_sums.append(q_sum)                              # buffered; stored once after loop

        # packed grads of sum(obj) wrt (mean, log_std): single scale after reduction
        grads = neg_inv_s * jnp.concatenate([ga_sum, gae_sum * std], axis=1)   # (B, 2A)

        # inference model: MLP(params, grads, state) -> additive update (approx_post.step)
        # layer-1 params+grads dots merged into ONE matmul via lane-packed (B, 4A) operand
        mlg = jnp.concatenate([ml, grads], axis=1)                       # (B, 4A)
        hi = jnp.tanh(jnp.dot(mlg.astype(jnp.bfloat16), wi1pg_bf,
                              preferred_element_type=jnp.float32) + base_inf)  # (B, H)
        ml = ml + jnp.dot(hi.astype(jnp.bfloat16), wi2_bf,
                          preferred_element_type=jnp.float32) + bi2      # (B, 2A)

    ml_out_ref[...] = ml
    # obj_it = -(1/S) * sum_s Q_s = neg_inv_s * q_sum - bq2 ; one lane-packed store
    obj_out_ref[...] = neg_inv_s * jnp.concatenate(q_sums, axis=1) - bq2  # (B, N_ITERS)
    # TODO(synk): 'errors' encoding branch (agent.q_value_estimator.get_errors()),
    #             retain_grads/clear_gradients and target-network bookkeeping are
    #             autograd/framework state with no Pallas equivalent.


def iterative_inference(mean0, logstd0, state, eps, w_slab):
    # pack mean/log_std and flatten the sample axis of eps host-side (lane/sublane dense)
    ml0 = jnp.concatenate([mean0, logstd0], axis=1)       # (B, 2A)
    eps_flat = eps.reshape(N_ITERS, SB, A)                # (N_ITERS, N_SAMPLES*B, A)

    vmem = pl.BlockSpec(memory_space=pltpu.MemorySpace.VMEM)
    out_shape = (
        jax.ShapeDtypeStruct((B, 2 * A), jnp.float32),    # final packed [mean | log_std]
        jax.ShapeDtypeStruct((B, N_ITERS), jnp.float32),  # per-iter (negated) objectives
    )
    ml_f, objs_bn = pl.pallas_call(
        _iterative_inference_kernel,
        out_shape=out_shape,
        in_specs=[vmem] * 4,
        out_specs=(vmem, vmem),
    )(w_slab, ml0, state, eps_flat)
    objs = jnp.transpose(objs_bn)[:, :, None]             # (N_ITERS, B, 1), PyTorch convention
    return ml_f[:, :A], ml_f[:, A:], objs


def init_params(key):
    """Deterministic synthetic weights, packed host-side into ONE f32 slab."""
    ks = jax.random.split(key, 4)
    d_q = S_DIM + A           # Q-net input dim (state ++ action)
    d_inf = 4 * A + S_DIM     # inference-net input dim (mean, log_std, g_mean, g_log_std, state)

    wq1 = jax.random.normal(ks[0], (d_q, H), jnp.float32) / jnp.sqrt(jnp.float32(d_q))
    bq1 = jnp.zeros((H,), jnp.float32)
    wq2 = jax.random.normal(ks[1], (H, 1), jnp.float32) / jnp.sqrt(jnp.float32(H))
    bq2 = jnp.float32(0.0)

    wi1 = jax.random.normal(ks[2], (d_inf, H), jnp.float32) / jnp.sqrt(jnp.float32(d_inf))
    bi1 = jnp.zeros((H,), jnp.float32)
    wi2 = 0.1 * jax.random.normal(ks[3], (H, 2 * A), jnp.float32) / jnp.sqrt(jnp.float32(H))
    bi2 = jnp.zeros((2 * A,), jnp.float32)

    slab = jnp.zeros((SLAB_ROWS, SLAB_LANES), jnp.float32)
    slab = slab.at[R_WQ1S:R_WQ1S + S_DIM, :].set(wq1[:S_DIM])                 # wq1s
    slab = slab.at[R_WQ1A:R_WQ1A + A, :].set(wq1[S_DIM:])                     # wq1a
    slab = slab.at[R_WQ1AT:R_WQ1AT + H, 0:A].set(jnp.transpose(wq1[S_DIM:]))  # wq1a^T
    slab = slab.at[R_MISC + 0, :].set(bq1)
    slab = slab.at[R_MISC + 1, :].set(wq2[:, 0])                              # wq2 row form
    slab = slab.at[R_MISC + 2, :].set(bi1)
    slab = slab.at[R_MISC + 3, 0:2 * A].set(bi2)
    slab = slab.at[R_MISC + 4, 0].set(bq2)
    slab = slab.at[R_WI1PG:R_WI1PG + 4 * A, :].set(wi1[0:4 * A])              # [params|grads] rows
    slab = slab.at[R_WI1S:R_WI1S + S_DIM, :].set(wi1[4 * A:])                 # state rows
    slab = slab.at[R_WI2:R_WI2 + H, 0:2 * A].set(wi2)                         # packed output layer
    return slab


if __name__ == "__main__":
    key = jax.random.PRNGKey(0)
    k_state, k_eps, k_mean, k_ls, k_params = jax.random.split(key, 5)

    state = jax.random.normal(k_state, (B, S_DIM), jnp.float32)
    mean0 = 0.1 * jax.random.normal(k_mean, (B, A), jnp.float32)
    logstd0 = -0.5 + 0.05 * jax.random.normal(k_ls, (B, A), jnp.float32)
    eps = jax.random.normal(k_eps, (N_ITERS, N_SAMPLES, B, A), jnp.float32)
    w_slab = init_params(k_params)

    mean_f, logstd_f, objs = iterative_inference(mean0, logstd0, state, eps, w_slab)
    jax.block_until_ready((mean_f, logstd_f, objs))

    assert mean_f.shape == (B, A)
    assert logstd_f.shape == (B, A)
    assert objs.shape == (N_ITERS, B, 1)
    assert bool(jnp.all(jnp.isfinite(mean_f))) and bool(jnp.all(jnp.isfinite(logstd_f)))
    assert bool(jnp.all(jnp.isfinite(objs)))
    print("KERNEL_OK")
</pallas_src>

<mosaic_0001>
module attributes {stable_mosaic.version = 11 : i64} {
  func.func @_iterative_inference_kernel(%arg0: memref<144x32xf32, #tpu.memory_space<vmem>>, %arg1: memref<8x16xf32, #tpu.memory_space<vmem>>, %arg2: memref<8x16xf32, #tpu.memory_space<vmem>>, %arg3: memref<3x32x8xf32, #tpu.memory_space<vmem>>, %arg4: memref<8x16xf32, #tpu.memory_space<vmem>>, %arg5: memref<8x3xf32, #tpu.memory_space<vmem>>) attributes {dimension_semantics = [], scalar_prefetch = 0 : i64, scratch_operands = 0 : i64, tpu.core_type = #tpu.core_type<tc>} {
    %c0 = arith.constant 0 : index
    %c0_0 = arith.constant 0 : index
    %0 = vector.load %arg1[%c0, %c0_0] : memref<8x16xf32, #tpu.memory_space<vmem>>, vector<8x16xf32>
    %c0_1 = arith.constant 0 : index
    %c0_2 = arith.constant 0 : index
    %1 = vector.load %arg2[%c0_1, %c0_2] : memref<8x16xf32, #tpu.memory_space<vmem>>, vector<8x16xf32>
    %c56 = arith.constant 56 : index
    %c0_3 = arith.constant 0 : index
    %2 = vector.load %arg0[%c56, %c0_3] : memref<144x32xf32, #tpu.memory_space<vmem>>, vector<8x32xf32>
    %3 = vector.extract_strided_slice %2 {offsets = [0, 0], sizes = [1, 32], strides = [1, 1]} : vector<8x32xf32> to vector<1x32xf32>
    %4 = vector.extract_strided_slice %2 {offsets = [1, 0], sizes = [1, 32], strides = [1, 1]} : vector<8x32xf32> to vector<1x32xf32>
    %5 = vector.extract_strided_slice %2 {offsets = [2, 0], sizes = [1, 32], strides = [1, 1]} : vector<8x32xf32> to vector<1x32xf32>
    %6 = vector.extract_strided_slice %2 {offsets = [3, 0], sizes = [1, 16], strides = [1, 1]} : vector<8x32xf32> to vector<1x16xf32>
    %7 = vector.extract_strided_slice %2 {offsets = [4, 0], sizes = [1, 1], strides = [1, 1]} : vector<8x32xf32> to vector<1x1xf32>
    %c16 = arith.constant 16 : index
    %c0_4 = arith.constant 0 : index
    %8 = vector.load %arg0[%c16, %c0_4] : memref<144x32xf32, #tpu.memory_space<vmem>>, vector<8x32xf32>
    %9 = arith.truncf %8 : vector<8x32xf32> to vector<8x32xbf16>
    %c24 = arith.constant 24 : index
    %c0_5 = arith.constant 0 : index
    %10 = vector.load %arg0[%c24, %c0_5] : memref<144x32xf32, #tpu.memory_space<vmem>>, vector<32x8xf32>
    %11 = arith.truncf %10 : vector<32x8xf32> to vector<32x8xbf16>
    %c64 = arith.constant 64 : index
    %c0_6 = arith.constant 0 : index
    %12 = vector.load %arg0[%c64, %c0_6] : memref<144x32xf32, #tpu.memory_space<vmem>>, vector<32x32xf32>
    %13 = arith.truncf %12 : vector<32x32xf32> to vector<32x32xbf16>
    %c112 = arith.constant 112 : index
    %c0_7 = arith.constant 0 : index
    %14 = vector.load %arg0[%c112, %c0_7] : memref<144x32xf32, #tpu.memory_space<vmem>>, vector<32x16xf32>
    %15 = arith.truncf %14 : vector<32x16xf32> to vector<32x16xbf16>
    %c0_8 = arith.constant 0 : index
    %c0_9 = arith.constant 0 : index
    %16 = vector.load %arg0[%c0_8, %c0_9] : memref<144x32xf32, #tpu.memory_space<vmem>>, vector<16x32xf32>
    %cst = arith.constant dense<0.000000e+00> : vector<8x32xf32>
    %17 = tpu.matmul %1, %16, %cst {dimension_numbers = #tpu.dot_dimension_numbers<[1], [0], [0], [1], [0, 0, 1, 1], [], []>} : vector<8x16xf32>, vector<16x32xf32>, vector<8x32xf32> -> vector<8x32xf32>
    %18 = vector.broadcast %3 : vector<1x32xf32> to vector<8x32xf32>
    %19 = arith.addf %17, %18 : vector<8x32xf32>
    %20 = tpu.concatenate %19, %19, %19, %19 in 0 : vector<8x32xf32>, vector<8x32xf32>, vector<8x32xf32>, vector<8x32xf32> -> vector<32x32xf32>
    %c96 = arith.constant 96 : index
    %c0_10 = arith.constant 0 : index
    %21 = vector.load %arg0[%c96, %c0_10] : memref<144x32xf32, #tpu.memory_space<vmem>>, vector<16x32xf32>
    %cst_11 = arith.constant dense<0.000000e+00> : vector<8x32xf32>
    %22 = tpu.matmul %1, %21, %cst_11 {dimension_numbers = #tpu.dot_dimension_numbers<[1], [0], [0], [1], [0, 0, 1, 1], [], []>} : vector<8x16xf32>, vector<16x32xf32>, vector<8x32xf32> -> vector<8x32xf32>
    %23 = vector.broadcast %5 : vector<1x32xf32> to vector<8x32xf32>
    %24 = arith.addf %22, %23 : vector<8x32xf32>
    %25 = vector.shape_cast %4 : vector<1x32xf32> to vector<1x32xf32>
    %26 = vector.broadcast %25 : vector<1x32xf32> to vector<32x32xf32>
    %27 = vector.extract_strided_slice %0 {offsets = [0, 0], sizes = [8, 8], strides = [1, 1]} : vector<8x16xf32> to vector<8x8xf32>
    %28 = vector.extract_strided_slice %0 {offsets = [0, 8], sizes = [8, 8], strides = [1, 1]} : vector<8x16xf32> to vector<8x8xf32>
    %29 = math.exp %28 : vector<8x8xf32>
    %c0_12 = arith.constant 0 : index
    %c0_13 = arith.constant 0 : index
    %c0_14 = arith.constant 0 : index
    %30 = vector.load %arg3[%c0_12, %c0_13, %c0_14] : memref<3x32x8xf32, #tpu.memory_space<vmem>>, vector<1x32x8xf32>
    %31 = vector.shape_cast %30 : vector<1x32x8xf32> to vector<32x8xf32>
    %32 = tpu.concatenate %27, %27, %27, %27 in 0 : vector<8x8xf32>, vector<8x8xf32>, vector<8x8xf32>, vector<8x8xf32> -> vector<32x8xf32>
    %33 = tpu.concatenate %29, %29, %29, %29 in 0 : vector<8x8xf32>, vector<8x8xf32>, vector<8x8xf32>, vector<8x8xf32> -> vector<32x8xf32>
    %34 = arith.mulf %33, %31 : vector<32x8xf32>
    %35 = arith.addf %32, %34 : vector<32x8xf32>
    %36 = arith.truncf %35 : vector<32x8xf32> to vector<32x8xbf16>
    %cst_15 = arith.constant dense<0.000000e+00> : vector<32x32xf32>
    %37 = tpu.matmul %36, %9, %cst_15 {dimension_numbers = #tpu.dot_dimension_numbers<[1], [0], [0], [1], [0, 0, 1, 1], [], []>} : vector<32x8xbf16>, vector<8x32xbf16>, vector<32x32xf32> -> vector<32x32xf32>
    %38 = arith.addf %20, %37 : vector<32x32xf32>
    %39 = math.tanh %38 : vector<32x32xf32>
    %40 = arith.mulf %39, %26 : vector<32x32xf32>
    %cst_16 = arith.constant dense<0.000000e+00> : vector<32xf32>
    %41 = vector.multi_reduction <add>, %40, %cst_16 [1] : vector<32x32xf32> to vector<32xf32>
    %42 = vector.shape_cast %41 : vector<32xf32> to vector<32x1xf32>
    %43 = arith.mulf %39, %39 : vector<32x32xf32>
    %cst_17 = arith.constant 1.000000e+00 : f32
    %44 = vector.broadcast %cst_17 : f32 to vector<32x32xf32>
    %45 = arith.subf %44, %43 : vector<32x32xf32>
    %46 = arith.mulf %45, %26 : vector<32x32xf32>
    %47 = arith.truncf %46 : vector<32x32xf32> to vector<32x32xbf16>
    %cst_18 = arith.constant dense<0.000000e+00> : vector<32x8xf32>
    %48 = tpu.matmul %47, %11, %cst_18 {dimension_numbers = #tpu.dot_dimension_numbers<[1], [0], [0], [1], [0, 0, 1, 1], [], []>} : vector<32x32xbf16>, vector<32x8xbf16>, vector<32x8xf32> -> vector<32x8xf32>
    %49 = vector.shape_cast %42 : vector<32x1xf32> to vector<4x8x1xf32>
    %cst_19 = arith.constant dense<0.000000e+00> : vector<8x1xf32>
    %50 = vector.multi_reduction <add>, %49, %cst_19 [0] : vector<4x8x1xf32> to vector<8x1xf32>
    %51 = vector.shape_cast %48 : vector<32x8xf32> to vector<4x8x8xf32>
    %cst_20 = arith.constant dense<0.000000e+00> : vector<8x8xf32>
    %52 = vector.multi_reduction <add>, %51, %cst_20 [0] : vector<4x8x8xf32> to vector<8x8xf32>
    %53 = arith.mulf %48, %31 : vector<32x8xf32>
    %54 = vector.shape_cast %53 : vector<32x8xf32> to vector<4x8x8xf32>
    %cst_21 = arith.constant dense<0.000000e+00> : vector<8x8xf32>
    %55 = vector.multi_reduction <add>, %54, %cst_21 [0] : vector<4x8x8xf32> to vector<8x8xf32>
    %56 = arith.mulf %55, %29 : vector<8x8xf32>
    %57 = tpu.concatenate %52, %56 in 1 : vector<8x8xf32>, vector<8x8xf32> -> vector<8x16xf32>
    %cst_22 = arith.constant -2.500000e-01 : f32
    %58 = vector.broadcast %cst_22 : f32 to vector<8x16xf32>
    %59 = arith.mulf %58, %57 : vector<8x16xf32>
    %60 = tpu.concatenate %0, %59 in 1 : vector<8x16xf32>, vector<8x16xf32> -> vector<8x32xf32>
    %61 = arith.truncf %60 : vector<8x32xf32> to vector<8x32xbf16>
    %cst_23 = arith.constant dense<0.000000e+00> : vector<8x32xf32>
    %62 = tpu.matmul %61, %13, %cst_23 {dimension_numbers = #tpu.dot_dimension_numbers<[1], [0], [0], [1], [0, 0, 1, 1], [], []>} : vector<8x32xbf16>, vector<32x32xbf16>, vector<8x32xf32> -> vector<8x32xf32>
    %63 = arith.addf %62, %24 : vector<8x32xf32>
    %64 = math.tanh %63 : vector<8x32xf32>
    %65 = arith.truncf %64 : vector<8x32xf32> to vector<8x32xbf16>
    %cst_24 = arith.constant dense<0.000000e+00> : vector<8x16xf32>
    %66 = tpu.matmul %65, %15, %cst_24 {dimension_numbers = #tpu.dot_dimension_numbers<[1], [0], [0], [1], [0, 0, 1, 1], [], []>} : vector<8x32xbf16>, vector<32x16xbf16>, vector<8x16xf32> -> vector<8x16xf32>
    %67 = arith.addf %0, %66 : vector<8x16xf32>
    %68 = vector.broadcast %6 : vector<1x16xf32> to vector<8x16xf32>
    %69 = arith.addf %67, %68 : vector<8x16xf32>
    %70 = vector.extract_strided_slice %69 {offsets = [0, 0], sizes = [8, 8], strides = [1, 1]} : vector<8x16xf32> to vector<8x8xf32>
    %71 = vector.extract_strided_slice %69 {offsets = [0, 8], sizes = [8, 8], strides = [1, 1]} : vector<8x16xf32> to vector<8x8xf32>
    %72 = math.exp %71 : vector<8x8xf32>
    %c1 = arith.constant 1 : index
    %c0_25 = arith.constant 0 : index
    %c0_26 = arith.constant 0 : index
    %73 = vector.load %arg3[%c1, %c0_25, %c0_26] : memref<3x32x8xf32, #tpu.memory_space<vmem>>, vector<1x32x8xf32>
    %74 = vector.shape_cast %73 : vector<1x32x8xf32> to vector<32x8xf32>
    %75 = tpu.concatenate %70, %70, %70, %70 in 0 : vector<8x8xf32>, vector<8x8xf32>, vector<8x8xf32>, vector<8x8xf32> -> vector<32x8xf32>
    %76 = tpu.concatenate %72, %72, %72, %72 in 0 : vector<8x8xf32>, vector<8x8xf32>, vector<8x8xf32>, vector<8x8xf32> -> vector<32x8xf32>
    %77 = arith.mulf %76, %74 : vector<32x8xf32>
    %78 = arith.addf %75, %77 : vector<32x8xf32>
    %79 = arith.truncf %78 : vector<32x8xf32> to vector<32x8xbf16>
    %cst_27 = arith.constant dense<0.000000e+00> : vector<32x32xf32>
    %80 = tpu.matmul %79, %9, %cst_27 {dimension_numbers = #tpu.dot_dimension_numbers<[1], [0], [0], [1], [0, 0, 1, 1], [], []>} : vector<32x8xbf16>, vector<8x32xbf16>, vector<32x32xf32> -> vector<32x32xf32>
    %81 = arith.addf %20, %80 : vector<32x32xf32>
    %82 = math.tanh %81 : vector<32x32xf32>
    %83 = arith.mulf %82, %26 : vector<32x32xf32>
    %cst_28 = arith.constant dense<0.000000e+00> : vector<32xf32>
    %84 = vector.multi_reduction <add>, %83, %cst_28 [1] : vector<32x32xf32> to vector<32xf32>
    %85 = vector.shape_cast %84 : vector<32xf32> to vector<32x1xf32>
    %86 = arith.mulf %82, %82 : vector<32x32xf32>
    %cst_29 = arith.constant 1.000000e+00 : f32
    %87 = vector.broadcast %cst_29 : f32 to vector<32x32xf32>
    %88 = arith.subf %87, %86 : vector<32x32xf32>
    %89 = arith.mulf %88, %26 : vector<32x32xf32>
    %90 = arith.truncf %89 : vector<32x32xf32> to vector<32x32xbf16>
    %cst_30 = arith.constant dense<0.000000e+00> : vector<32x8xf32>
    %91 = tpu.matmul %90, %11, %cst_30 {dimension_numbers = #tpu.dot_dimension_numbers<[1], [0], [0], [1], [0, 0, 1, 1], [], []>} : vector<32x32xbf16>, vector<32x8xbf16>, vector<32x8xf32> -> vector<32x8xf32>
    %92 = vector.shape_cast %85 : vector<32x1xf32> to vector<4x8x1xf32>
    %cst_31 = arith.constant dense<0.000000e+00> : vector<8x1xf32>
    %93 = vector.multi_reduction <add>, %92, %cst_31 [0] : vector<4x8x1xf32> to vector<8x1xf32>
    %94 = vector.shape_cast %91 : vector<32x8xf32> to vector<4x8x8xf32>
    %cst_32 = arith.constant dense<0.000000e+00> : vector<8x8xf32>
    %95 = vector.multi_reduction <add>, %94, %cst_32 [0] : vector<4x8x8xf32> to vector<8x8xf32>
    %96 = arith.mulf %91, %74 : vector<32x8xf32>
    %97 = vector.shape_cast %96 : vector<32x8xf32> to vector<4x8x8xf32>
    %cst_33 = arith.constant dense<0.000000e+00> : vector<8x8xf32>
    %98 = vector.multi_reduction <add>, %97, %cst_33 [0] : vector<4x8x8xf32> to vector<8x8xf32>
    %99 = arith.mulf %98, %72 : vector<8x8xf32>
    %100 = tpu.concatenate %95, %99 in 1 : vector<8x8xf32>, vector<8x8xf32> -> vector<8x16xf32>
    %cst_34 = arith.constant -2.500000e-01 : f32
    %101 = vector.broadcast %cst_34 : f32 to vector<8x16xf32>
    %102 = arith.mulf %101, %100 : vector<8x16xf32>
    %103 = tpu.concatenate %69, %102 in 1 : vector<8x16xf32>, vector<8x16xf32> -> vector<8x32xf32>
    %104 = arith.truncf %103 : vector<8x32xf32> to vector<8x32xbf16>
    %cst_35 = arith.constant dense<0.000000e+00> : vector<8x32xf32>
    %105 = tpu.matmul %104, %13, %cst_35 {dimension_numbers = #tpu.dot_dimension_numbers<[1], [0], [0], [1], [0, 0, 1, 1], [], []>} : vector<8x32xbf16>, vector<32x32xbf16>, vector<8x32xf32> -> vector<8x32xf32>
    %106 = arith.addf %105, %24 : vector<8x32xf32>
    %107 = math.tanh %106 : vector<8x32xf32>
    %108 = arith.truncf %107 : vector<8x32xf32> to vector<8x32xbf16>
    %cst_36 = arith.constant dense<0.000000e+00> : vector<8x16xf32>
    %109 = tpu.matmul %108, %15, %cst_36 {dimension_numbers = #tpu.dot_dimension_numbers<[1], [0], [0], [1], [0, 0, 1, 1], [], []>} : vector<8x32xbf16>, vector<32x16xbf16>, vector<8x16xf32> -> vector<8x16xf32>
    %110 = arith.addf %69, %109 : vector<8x16xf32>
    %111 = vector.broadcast %6 : vector<1x16xf32> to vector<8x16xf32>
    %112 = arith.addf %110, %111 : vector<8x16xf32>
    %113 = vector.extract_strided_slice %112 {offsets = [0, 0], sizes = [8, 8], strides = [1, 1]} : vector<8x16xf32> to vector<8x8xf32>
    %114 = vector.extract_strided_slice %112 {offsets = [0, 8], sizes = [8, 8], strides = [1, 1]} : vector<8x16xf32> to vector<8x8xf32>
    %115 = math.exp %114 : vector<8x8xf32>
    %c2 = arith.constant 2 : index
    %c0_37 = arith.constant 0 : index
    %c0_38 = arith.constant 0 : index
    %116 = vector.load %arg3[%c2, %c0_37, %c0_38] : memref<3x32x8xf32, #tpu.memory_space<vmem>>, vector<1x32x8xf32>
    %117 = vector.shape_cast %116 : vector<1x32x8xf32> to vector<32x8xf32>
    %118 = tpu.concatenate %113, %113, %113, %113 in 0 : vector<8x8xf32>, vector<8x8xf32>, vector<8x8xf32>, vector<8x8xf32> -> vector<32x8xf32>
    %119 = tpu.concatenate %115, %115, %115, %115 in 0 : vector<8x8xf32>, vector<8x8xf32>, vector<8x8xf32>, vector<8x8xf32> -> vector<32x8xf32>
    %120 = arith.mulf %119, %117 : vector<32x8xf32>
    %121 = arith.addf %118, %120 : vector<32x8xf32>
    %122 = arith.truncf %121 : vector<32x8xf32> to vector<32x8xbf16>
    %cst_39 = arith.constant dense<0.000000e+00> : vector<32x32xf32>
    %123 = tpu.matmul %122, %9, %cst_39 {dimension_numbers = #tpu.dot_dimension_numbers<[1], [0], [0], [1], [0, 0, 1, 1], [], []>} : vector<32x8xbf16>, vector<8x32xbf16>, vector<32x32xf32> -> vector<32x32xf32>
    %124 = arith.addf %20, %123 : vector<32x32xf32>
    %125 = math.tanh %124 : vector<32x32xf32>
    %126 = arith.mulf %125, %26 : vector<32x32xf32>
    %cst_40 = arith.constant dense<0.000000e+00> : vector<32xf32>
    %127 = vector.multi_reduction <add>, %126, %cst_40 [1] : vector<32x32xf32> to vector<32xf32>
    %128 = vector.shape_cast %127 : vector<32xf32> to vector<32x1xf32>
    %129 = arith.mulf %125, %125 : vector<32x32xf32>
    %cst_41 = arith.constant 1.000000e+00 : f32
    %130 = vector.broadcast %cst_41 : f32 to vector<32x32xf32>
    %131 = arith.subf %130, %129 : vector<32x32xf32>
    %132 = arith.mulf %131, %26 : vector<32x32xf32>
    %133 = arith.truncf %132 : vector<32x32xf32> to vector<32x32xbf16>
    %cst_42 = arith.constant dense<0.000000e+00> : vector<32x8xf32>
    %134 = tpu.matmul %133, %11, %cst_42 {dimension_numbers = #tpu.dot_dimension_numbers<[1], [0], [0], [1], [0, 0, 1, 1], [], []>} : vector<32x32xbf16>, vector<32x8xbf16>, vector<32x8xf32> -> vector<32x8xf32>
    %135 = vector.shape_cast %128 : vector<32x1xf32> to vector<4x8x1xf32>
    %cst_43 = arith.constant dense<0.000000e+00> : vector<8x1xf32>
    %136 = vector.multi_reduction <add>, %135, %cst_43 [0] : vector<4x8x1xf32> to vector<8x1xf32>
    %137 = vector.shape_cast %134 : vector<32x8xf32> to vector<4x8x8xf32>
    %cst_44 = arith.constant dense<0.000000e+00> : vector<8x8xf32>
    %138 = vector.multi_reduction <add>, %137, %cst_44 [0] : vector<4x8x8xf32> to vector<8x8xf32>
    %139 = arith.mulf %134, %117 : vector<32x8xf32>
    %140 = vector.shape_cast %139 : vector<32x8xf32> to vector<4x8x8xf32>
    %cst_45 = arith.constant dense<0.000000e+00> : vector<8x8xf32>
    %141 = vector.multi_reduction <add>, %140, %cst_45 [0] : vector<4x8x8xf32> to vector<8x8xf32>
    %142 = arith.mulf %141, %115 : vector<8x8xf32>
    %143 = tpu.concatenate %138, %142 in 1 : vector<8x8xf32>, vector<8x8xf32> -> vector<8x16xf32>
    %cst_46 = arith.constant -2.500000e-01 : f32
    %144 = vector.broadcast %cst_46 : f32 to vector<8x16xf32>
    %145 = arith.mulf %144, %143 : vector<8x16xf32>
    %146 = tpu.concatenate %112, %145 in 1 : vector<8x16xf32>, vector<8x16xf32> -> vector<8x32xf32>
    %147 = arith.truncf %146 : vector<8x32xf32> to vector<8x32xbf16>
    %cst_47 = arith.constant dense<0.000000e+00> : vector<8x32xf32>
    %148 = tpu.matmul %147, %13, %cst_47 {dimension_numbers = #tpu.dot_dimension_numbers<[1], [0], [0], [1], [0, 0, 1, 1], [], []>} : vector<8x32xbf16>, vector<32x32xbf16>, vector<8x32xf32> -> vector<8x32xf32>
    %149 = arith.addf %148, %24 : vector<8x32xf32>
    %150 = math.tanh %149 : vector<8x32xf32>
    %151 = arith.truncf %150 : vector<8x32xf32> to vector<8x32xbf16>
    %cst_48 = arith.constant dense<0.000000e+00> : vector<8x16xf32>
    %152 = tpu.matmul %151, %15, %cst_48 {dimension_numbers = #tpu.dot_dimension_numbers<[1], [0], [0], [1], [0, 0, 1, 1], [], []>} : vector<8x32xbf16>, vector<32x16xbf16>, vector<8x16xf32> -> vector<8x16xf32>
    %153 = arith.addf %112, %152 : vector<8x16xf32>
    %154 = vector.broadcast %6 : vector<1x16xf32> to vector<8x16xf32>
    %155 = arith.addf %153, %154 : vector<8x16xf32>
    %c0_49 = arith.constant 0 : index
    %c0_50 = arith.constant 0 : index
    %156 = vector.load %arg4[%c0_49, %c0_50] : memref<8x16xf32, #tpu.memory_space<vmem>>, vector<8x16xf32>
    tpu.vector_store %arg4[%c0_49, %c0_50], %155 {strides = array<i32>} : memref<8x16xf32, #tpu.memory_space<vmem>>, vector<8x16xf32>,
    %157 = tpu.concatenate %50, %93, %136 in 1 : vector<8x1xf32>, vector<8x1xf32>, vector<8x1xf32> -> vector<8x3xf32>
    %cst_51 = arith.constant -2.500000e-01 : f32
    %158 = vector.broadcast %cst_51 : f32 to vector<8x3xf32>
    %159 = arith.mulf %158, %157 : vector<8x3xf32>
    %160 = vector.broadcast %7 : vector<1x1xf32> to vector<8x3xf32>
    %161 = arith.subf %159, %160 : vector<8x3xf32>
    %c0_52 = arith.constant 0 : index
    %c0_53 = arith.constant 0 : index
    %162 = vector.load %arg5[%c0_52, %c0_53] : memref<8x3xf32, #tpu.memory_space<vmem>>, vector<8x3xf32>
    tpu.vector_store %arg5[%c0_52, %c0_53], %161 {strides = array<i32>} : memref<8x3xf32, #tpu.memory_space<vmem>>, vector<8x3xf32>,
    return
  }
}

</mosaic_0001>

<llo_original>
// kernel: tpu_custom_call.1
$region0: #{tpu_custom_call.1}
  #allocation0 [shape = 'u32[]', space=smem, size = 0x4, offset = 0x4, fixed_abs, tag = 'smem constant byte address 0x4 - core index']
  #allocation1 [shape = 'u32[144,128]{1,0:T(1,128)}', space=vmem, size = 0x12000, scoped, tag = 'internal scratch']
  %s0 = inlined_call_operand.vmem [shape: f32[144,32], index: 0, kind: input, shape index: {}]
  %s1 = inlined_call_operand.vmem [shape: f32[8,16], index: 1, kind: input, shape index: {}]
  %s2 = inlined_call_operand.vmem [shape: f32[8,16], index: 2, kind: input, shape index: {}]
  %s3 = inlined_call_operand.vmem [shape: f32[3,32,8], index: 3, kind: input, shape index: {}]
  %s4 = inlined_call_operand.hbm [shape: f32[8,16], index: 4, kind: output, shape index: {0}]
  %s5 = inlined_call_operand.vmem [shape: f32[8,3], index: 5, kind: output, shape index: {1}]
  %6 = xla_tuple %s4, %s5
  %s7 = sld [smem:[#allocation0]]
  $region34: #{tpu_custom_call.1} parent=0
    _
  %s9 = ssub.s32 1, %s7
  %s10 = scalar_select 0, %s9, %s7
  $region1: #{tpu_custom_call.1} parent=0
    #allocation2 [shape = 'u8[4096]{0}', space=vmem, size = 0x1000, scoped, tag = 'output window, operand 0, single buffered']
    #allocation3 [shape = 's32[1]{0}', space=sflag, size = 0x4, scoped, tag = 'scoped memory for tpu_custom_call.1']
    %11 = vsyncpa [#allocation3], 0
    // Predicated region
    $region2: #{tpu_custom_call.1} parent=1 // pred_check
      _
    $region3: #{tpu_custom_call.1} parent=1 // pred_check_branch
      %13 = sbr.rel (0) target = $region5
    $region4: #{tpu_custom_call.1} parent=1 // pred_region
      _
    $region5: #{tpu_custom_call.1} parent=1 // pred_fallthru
      _
    // Predicated region
    $region6: #{tpu_custom_call.1} parent=1 // pred_check
      _
    $region7: #{tpu_custom_call.1} parent=1 // pred_check_branch
      %15 = sbr.rel (0) target = $region9
    $region8: #{tpu_custom_call.1} parent=1 // pred_region
      _
    $region9: #{tpu_custom_call.1} parent=1 // pred_fallthru
      _
    // Predicated region
    $region10: #{tpu_custom_call.1} parent=1 // pred_check
      _
    $region11: #{tpu_custom_call.1} parent=1 // pred_check_branch
      %17 = sbr.rel (0) target = $region13
    $region12: #{tpu_custom_call.1} parent=1 // pred_region
      _
    $region13: #{tpu_custom_call.1} parent=1 // pred_fallthru
      _
    // Predicated region
    $region14: #{tpu_custom_call.1} parent=1 // pred_check
      _
    $region15: #{tpu_custom_call.1} parent=1 // pred_check_branch
      %19 = sbr.rel (0) target = $region17
    $region16: #{tpu_custom_call.1} parent=1 // pred_region
      _
    $region17: #{tpu_custom_call.1} parent=1 // pred_fallthru
      _
    %v21 = vld [vmem:[%s1] sm:$0xff]
    %v22 = vld [vmem:[%s2] sm:$0xff]
    %v23 = vld [vmem:[%s0 + $0x38] sm:$0xff]
    %v24 = vld [vmem:[%s0 + $0x10] sm:$0xff]
    %v25 = vpack.c.bf16 %v24, %v24
    %v26 = vld [vmem:[%s0 + $0x18] sm:$0xff]
    %v27 = vld [vmem:[%s0 + $0x20] sm:$0xff]
    %v28 = vld [vmem:[%s0 + $0x28] sm:$0xff]
    %v29 = vld [vmem:[%s0 + $0x30] sm:$0xff]
    %v30 = vpack.c.bf16 %v27, %v26
    %v31 = vpack.c.bf16 %v29, %v28
    %v32 = vld [vmem:[%s0 + $0x40] sm:$0xff]
    %v33 = vld [vmem:[%s0 + $0x48] sm:$0xff]
    %v34 = vld [vmem:[%s0 + $0x50] sm:$0xff]
    %v35 = vld [vmem:[%s0 + $0x58] sm:$0xff]
    %v36 = vpack.c.bf16 %v33, %v32
    %v37 = vpack.c.bf16 %v35, %v34
    %v38 = vld [vmem:[%s0 + $0x70] sm:$0xff]
    %v39 = vld [vmem:[%s0 + $0x78] sm:$0xff]
    %v40 = vld [vmem:[%s0 + $0x80] sm:$0xff]
    %v41 = vld [vmem:[%s0 + $0x88] sm:$0xff]
    %v42 = vpack.c.bf16 %v39, %v38
    %v43 = vpack.c.bf16 %v41, %v40
    %v44 = vld [vmem:[%s0] sm:$0xff]
    %v45 = vld [vmem:[%s0 + $0x8] sm:$0xff]
    %v46 = vlaneseq
    %v47 = vshrl.u32 %v46, 7
    %v48 = vsub.s32 0, %v47
    %v49 = vrot.slane %v23, %v48
    %vm50 = vcmask 130048
    %v52 = vsel %vm50, %v22, 0
    %54 = vmatprep.subr.mxu0 0.0
    %55 = vmatpush1.msra.mxu0 %v44
    %56 = vmatprep.subr.mxu0 0.0
    %57 = vmatpush1.msra.mxu0 %v45
    %58 = vmatprep.subr.mxu0 0.0
    %59 = vmatpush1.msra.mxu0 0.0
    %60 = vmatprep.subr.mxu0 0.0
    %61 = vmatpush1.msra.mxu0 0.0
    %62 = vmatprep.subr.mxu0 0.0
    %63 = vmatpush1.msra.mxu0 0.0
    %64 = vmatprep.subr.mxu0 0.0
    %65 = vmatpush1.msra.mxu0 0.0
    %66 = vmatprep.subr.mxu0 0.0
    %67 = vmatpush1.msra.mxu0 0.0
    %68 = vmatprep.subr.mxu0 0.0
    %69 = vmatpush1.msra.mxu0 0.0
    %70 = vmatprep.subr.mxu0 0.0
    %71 = vmatpush1.msra.mxu0 0.0
    %72 = vmatprep.subr.mxu0 0.0
    %73 = vmatpush1.msra.mxu0 0.0
    %74 = vmatprep.subr.mxu0 0.0
    %75 = vmatpush1.msra.mxu0 0.0
    %76 = vmatprep.subr.mxu0 0.0
    %77 = vmatpush1.msra.mxu0 0.0
    %78 = vmatprep.subr.mxu0 0.0
    %79 = vmatpush1.msra.mxu0 0.0
    %80 = vmatprep.subr.mxu0 0.0
    %81 = vmatpush1.msra.mxu0 0.0
    %82 = vmatprep.subr.mxu0 0.0
    %83 = vmatpush1.msra.mxu0 0.0
    %84 = vmatprep.subr.mxu0 0.0
    %85 = vmatpush1.msra.mxu0 0.0
    %86 = vmatprep.subr.mxu0 0.0
    %87 = vmatpush1.msra.mxu0 0.0
    %88 = vmatprep.subr.mxu0 0.0
    %89 = vmatpush1.msra.mxu0 0.0
    %90 = vmatprep.subr.mxu0 0.0
    %91 = vmatpush1.msra.mxu0 0.0
    %92 = vmatprep.subr.mxu0 0.0
    %93 = vmatpush1.msra.mxu0 0.0
    %94 = vmatprep.subr.mxu0 0.0
    %95 = vmatpush1.msra.mxu0 0.0
    %96 = vmatprep.subr.mxu0 0.0
    %97 = vmatpush1.msra.mxu0 0.0
    %98 = vmatprep.subr.mxu0 0.0
    %99 = vmatpush1.msra.mxu0 0.0
    %100 = vmatprep.subr.mxu0 0.0
    %101 = vmatpush1.msra.mxu0 0.0
    %102 = vmatprep.subr.mxu0 0.0
    %103 = vmatpush1.msra.mxu0 0.0
    %104 = vmatprep.subr.mxu0 0.0
    %105 = vmatpush1.msra.mxu0 0.0
    %106 = vmatprep.subr.mxu0 0.0
    %107 = vmatpush1.msra.mxu0 0.0
    %108 = vmatprep.subr.mxu0 0.0
    %109 = vmatpush1.msra.mxu0 0.0
    %110 = vmatprep.subr.mxu0 0.0
    %111 = vmatpush1.msra.mxu0 0.0
    %112 = vmatprep.subr.mxu0 0.0
    %113 = vmatpush1.msra.mxu0 0.0
    %114 = vmatprep.subr.mxu0 0.0
    %115 = vmatpush1.msra.mxu0 0.0
    %116 = vmatprep.subr.mxu0 0.0
    %117 = vmatpush1.msra.mxu0 0.0
    %118 = vmatprep.mubr.f32.mxu0 0.0
    %119 = vmatmul.mubr.f32.gmra.mrb[0].mxu0 %v52
    %v120 = vpop.f32.mrb[0].mxu0
    %v121 = vadd.f32 %v49, %v120
    %v122 = vpop.f32.mrb[0].mxu0
    %123 = vdwg.mxu0
    %v124 = vld [vmem:[%s0 + $0x60] sm:$0xff]
    %v125 = vld [vmem:[%s0 + $0x68] sm:$0xff]
    %v126 = vlaneseq
    %v127 = vshrl.u32 %v126, 7
    %v128 = vsub.s32 2, %v127
    %v129 = vrot.slane %v23, %v128
    %130 = vmatprep.subr.mxu0 0.0
    %131 = vmatpush1.msra.mxu0 %v124
    %132 = vmatprep.subr.mxu0 0.0
    %133 = vmatpush1.msra.mxu0 %v125
    %134 = vmatprep.subr.mxu0 0.0
    %135 = vmatpush1.msra.mxu0 0.0
    %136 = vmatprep.subr.mxu0 0.0
    %137 = vmatpush1.msra.mxu0 0.0
    %138 = vmatprep.subr.mxu0 0.0
    %139 = vmatpush1.msra.mxu0 0.0
    %140 = vmatprep.subr.mxu0 0.0
    %141 = vmatpush1.msra.mxu0 0.0
    %142 = vmatprep.subr.mxu0 0.0
    %143 = vmatpush1.msra.mxu0 0.0
    %144 = vmatprep.subr.mxu0 0.0
    %145 = vmatpush1.msra.mxu0 0.0
    %146 = vmatprep.subr.mxu0 0.0
    %147 = vmatpush1.msra.mxu0 0.0
    %148 = vmatprep.subr.mxu0 0.0
    %149 = vmatpush1.msra.mxu0 0.0
    %150 = vmatprep.subr.mxu0 0.0
    %151 = vmatpush1.msra.mxu0 0.0
    %152 = vmatprep.subr.mxu0 0.0
    %153 = vmatpush1.msra.mxu0 0.0
    %154 = vmatprep.subr.mxu0 0.0
    %155 = vmatpush1.msra.mxu0 0.0
    %156 = vmatprep.subr.mxu0 0.0
    %157 = vmatpush1.msra.mxu0 0.0
    %158 = vmatprep.subr.mxu0 0.0
    %159 = vmatpush1.msra.mxu0 0.0
    %160 = vmatprep.subr.mxu0 0.0
    %161 = vmatpush1.msra.mxu0 0.0
    %162 = vmatprep.subr.mxu0 0.0
    %163 = vmatpush1.msra.mxu0 0.0
    %164 = vmatprep.subr.mxu0 0.0
    %165 = vmatpush1.msra.mxu0 0.0
    %166 = vmatprep.subr.mxu0 0.0
    %167 = vmatpush1.msra.mxu0 0.0
    %168 = vmatprep.subr.mxu0 0.0
    %169 = vmatpush1.msra.mxu0 0.0
    %170 = vmatprep.subr.mxu0 0.0
    %171 = vmatpush1.msra.mxu0 0.0
    %172 = vmatprep.subr.mxu0 0.0
    %173 = vmatpush1.msra.mxu0 0.0
    %174 = vmatprep.subr.mxu0 0.0
    %175 = vmatpush1.msra.mxu0 0.0
    %176 = vmatprep.subr.mxu0 0.0
    %177 = vmatpush1.msra.mxu0 0.0
    %178 = vmatprep.subr.mxu0 0.0
    %179 = vmatpush1.msra.mxu0 0.0
    %180 = vmatprep.subr.mxu0 0.0
    %181 = vmatpush1.msra.mxu0 0.0
    %182 = vmatprep.subr.mxu0 0.0
    %183 = vmatpush1.msra.mxu0 0.0
    %184 = vmatprep.subr.mxu0 0.0
    %185 = vmatpush1.msra.mxu0 0.0
    %186 = vmatprep.subr.mxu0 0.0
    %187 = vmatpush1.msra.mxu0 0.0
    %188 = vmatprep.subr.mxu0 0.0
    %189 = vmatpush1.msra.mxu0 0.0
    %190 = vmatprep.subr.mxu0 0.0
    %191 = vmatpush1.msra.mxu0 0.0
    %192 = vmatprep.subr.mxu0 0.0
    %193 = vmatpush1.msra.mxu0 0.0
    %194 = vmatprep.mubr.f32.mxu0 0.0
    %195 = vmatmul.mubr.f32.gmra.mrb[0].mxu0 %v52
    %v196 = vpop.f32.mrb[0].mxu0
    %v197 = vadd.f32 %v129, %v196
    %v198 = vpop.f32.mrb[0].mxu0
    %199 = vdwg.mxu0
    %v200 = vlaneseq
    %v201 = vshrl.u32 %v200, 7
    %v202 = vsub.s32 1, %v201
    %v203 = vrot.slane %v23, %v202
    %v204 = vmul.f32 %v21, 1.442695
    %v205 = vpow.pop %v204
    %v206 = vld [vmem:[%s3] sm:$0xff]
    %v207 = vld [vmem:[%s3 + $0x8] sm:$0xff]
    %v208 = vld [vmem:[%s3 + $0x10] sm:$0xff]
    %v209 = vld [vmem:[%s3 + $0x18] sm:$0xff]
    %214 = vrot.lane.b32.xlu0 %v206, 8
    %v215 = vpop.permute.xlu0 %214
    %216 = vrot.lane.b32.xlu0 %v207, 8
    %v217 = vpop.permute.xlu0 %216
    %218 = vrot.lane.b32.xlu0 %v208, 8
    %v219 = vpop.permute.xlu0 %218
    %220 = vrot.lane.b32.xlu0 %v209, 8
    %v221 = vpop.permute.xlu0 %220
    %v226 = vmul.f32 %v205, %v215
    %v227 = vmul.f32 %v205, %v217
    %v228 = vmul.f32 %v205, %v219
    %v229 = vmul.f32 %v205, %v221
    %234 = vrot.lane.b32.xlu0 %v226, 120
    %v235 = vpop.permute.xlu0 %234
    %236 = vrot.lane.b32.xlu0 %v227, 120
    %v237 = vpop.permute.xlu0 %236
    %238 = vrot.lane.b32.xlu0 %v228, 120
    %v239 = vpop.permute.xlu0 %238
    %240 = vrot.lane.b32.xlu0 %v229, 120
    %v241 = vpop.permute.xlu0 %240
    %v246 = vadd.f32 %v21, %v235
    %v247 = vadd.f32 %v21, %v237
    %v248 = vadd.f32 %v21, %v239
    %v249 = vadd.f32 %v21, %v241
    %v250 = vpack.c.bf16 %v247, %v246
    %v251 = vpack.c.bf16 %v249, %v248
    %vm252 = vcmask 64512
    %v254 = vsel %vm252, %v250, 0
    %v257 = vsel %vm252, %v251, 0
    %vm259 = vcmask 1043456
    %v261 = vsel %vm259, %v25, 0
    %263 = vmatprep.subr.bf16.mxu0 0
    %264 = vmatpush1.bf16.msra.mxu0 %v261
    %265 = vmatprep.subr.bf16.mxu0 0
    %266 = vmatpush1.bf16.msra.mxu0 0
    %267 = vmatprep.subr.bf16.mxu0 0
    %268 = vmatpush1.bf16.msra.mxu0 0
    %269 = vmatprep.subr.bf16.mxu0 0
    %270 = vmatpush1.bf16.msra.mxu0 0
    %271 = vmatprep.subr.bf16.mxu0 0
    %272 = vmatpush1.bf16.msra.mxu0 0
    %273 = vmatprep.subr.bf16.mxu0 0
    %274 = vmatpush1.bf16.msra.mxu0 0
    %275 = vmatprep.subr.bf16.mxu0 0
    %276 = vmatpush1.bf16.msra.mxu0 0
    %277 = vmatprep.subr.bf16.mxu0 0
    %278 = vmatpush1.bf16.msra.mxu0 0
    %279 = vmatprep.subr.bf16.mxu0 0
    %280 = vmatpush1.bf16.msra.mxu0 0
    %281 = vmatprep.subr.bf16.mxu0 0
    %282 = vmatpush1.bf16.msra.mxu0 0
    %283 = vmatprep.subr.bf16.mxu0 0
    %284 = vmatpush1.bf16.msra.mxu0 0
    %285 = vmatprep.subr.bf16.mxu0 0
    %286 = vmatpush1.bf16.msra.mxu0 0
    %287 = vmatprep.subr.bf16.mxu0 0
    %288 = vmatpush1.bf16.msra.mxu0 0
    %289 = vmatprep.subr.bf16.mxu0 0
    %290 = vmatpush1.bf16.msra.mxu0 0
    %291 = vmatprep.subr.bf16.mxu0 0
    %292 = vmatpush1.bf16.msra.mxu0 0
    %293 = vmatprep.subr.bf16.mxu0 0
    %294 = vmatpush1.bf16.msra.mxu0 0
    %295 = vmatprep.mubr.bf16.mxu0 0
    %296 = vmatmul.mubr.bf16.gmra.mrb[0].mxu0 %v254
    %v297 = vpop.f32.mrb[0].mxu0
    %v298 = vadd.f32 0.0, %v297
    %v299 = vpop.f32.mrb[0].mxu0
    %v300 = vpop.f32.mrb[0].mxu0
    %v301 = vadd.f32 0.0, %v300
    %v302 = vpop.f32.mrb[0].mxu0
    %303 = vmatprep.mubr.bf16.mxu0 0
    %304 = vmatmul.mubr.bf16.gmra.mrb[0].mxu0 %v257
    %v305 = vpop.f32.mrb[0].mxu0
    %v306 = vadd.f32 0.0, %v305
    %v307 = vpop.f32.mrb[0].mxu0
    %v308 = vpop.f32.mrb[0].mxu0
    %v309 = vadd.f32 0.0, %v308
    %v310 = vpop.f32.mrb[0].mxu0
    %311 = vdwg.mxu0
    %v312 = vadd.f32 %v121, %v298
    %v313 = vadd.f32 %v121, %v301
    %v314 = vadd.f32 %v121, %v306
    %v315 = vadd.f32 %v121, %v309
    %v316 = vtanh.pop %v312
    %v317 = vtanh.pop %v313
    %v318 = vtanh.pop %v314
    %v319 = vtanh.pop %v315
    %v320 = vmul.f32 %v316, %v203
    %v321 = vmul.f32 %v317, %v203
    %v322 = vmul.f32 %v318, %v203
    %v323 = vmul.f32 %v319, %v203
    %vm324 = vcmask 261120
    %v325 = vsel %vm324, %v320, 0.0
    %326 = vadd.xlane.f32.xlu0 %v325
    %v327 = vpop.xlane.xlu0 %326
    %v328 = vsel %vm324, %v321, 0.0
    %329 = vadd.xlane.f32.xlu0 %v328
    %v330 = vpop.xlane.xlu0 %329
    %v331 = vsel %vm324, %v322, 0.0
    %332 = vadd.xlane.f32.xlu0 %v331
    %v333 = vpop.xlane.xlu0 %332
    %v334 = vsel %vm324, %v323, 0.0
    %335 = vadd.xlane.f32.xlu0 %v334
    %v336 = vpop.xlane.xlu0 %335
    %v337 = vmul.f32 %v316, %v316
    %v338 = vmul.f32 %v317, %v317
    %v339 = vmul.f32 %v318, %v318
    %v340 = vmul.f32 %v319, %v319
    %v341 = vsub.f32 1.0, %v337
    %v342 = vsub.f32 1.0, %v338
    %v343 = vsub.f32 1.0, %v339
    %v344 = vsub.f32 1.0, %v340
    %v345 = vmul.f32 %v341, %v203
    %v346 = vmul.f32 %v342, %v203
    %v347 = vmul.f32 %v343, %v203
    %v348 = vmul.f32 %v344, %v203
    %v349 = vpack.c.bf16 %v346, %v345
    %v350 = vpack.c.bf16 %v348, %v347
    %v352 = vsel %vm324, %v349, 0
    %v355 = vsel %vm324, %v350, 0
    %357 = vmatprep.subr.bf16.mxu0 0
    %358 = vmatpush1.bf16.msra.mxu0 %v30
    %359 = vmatprep.subr.bf16.mxu0 0
    %360 = vmatpush1.bf16.msra.mxu0 %v31
    %361 = vmatprep.subr.bf16.mxu0 0
    %362 = vmatpush1.bf16.msra.mxu0 0
    %363 = vmatprep.subr.bf16.mxu0 0
    %364 = vmatpush1.bf16.msra.mxu0 0
    %365 = vmatprep.subr.bf16.mxu0 0
    %366 = vmatpush1.bf16.msra.mxu0 0
    %367 = vmatprep.subr.bf16.mxu0 0
    %368 = vmatpush1.bf16.msra.mxu0 0
    %369 = vmatprep.subr.bf16.mxu0 0
    %370 = vmatpush1.bf16.msra.mxu0 0
    %371 = vmatprep.subr.bf16.mxu0 0
    %372 = vmatpush1.bf16.msra.mxu0 0
    %373 = vmatprep.subr.bf16.mxu0 0
    %374 = vmatpush1.bf16.msra.mxu0 0
    %375 = vmatprep.subr.bf16.mxu0 0
    %376 = vmatpush1.bf16.msra.mxu0 0
    %377 = vmatprep.subr.bf16.mxu0 0
    %378 = vmatpush1.bf16.msra.mxu0 0
    %379 = vmatprep.subr.bf16.mxu0 0
    %380 = vmatpush1.bf16.msra.mxu0 0
    %381 = vmatprep.subr.bf16.mxu0 0
    %382 = vmatpush1.bf16.msra.mxu0 0
    %383 = vmatprep.subr.bf16.mxu0 0
    %384 = vmatpush1.bf16.msra.mxu0 0
    %385 = vmatprep.subr.bf16.mxu0 0
    %386 = vmatpush1.bf16.msra.mxu0 0
    %387 = vmatprep.subr.bf16.mxu0 0
    %388 = vmatpush1.bf16.msra.mxu0 0
    %389 = vmatprep.mubr.bf16.mxu0 0
    %390 = vmatmul.mubr.bf16.gmra.mrb[0].mxu0 %v352
    %v391 = vpop.f32.mrb[0].mxu0
    %v392 = vadd.f32 0.0, %v391
    %v393 = vpop.f32.mrb[0].mxu0
    %v394 = vpop.f32.mrb[0].mxu0
    %v395 = vadd.f32 0.0, %v394
    %v396 = vpop.f32.mrb[0].mxu0
    %397 = vmatprep.mubr.bf16.mxu0 0
    %398 = vmatmul.mubr.bf16.gmra.mrb[0].mxu0 %v355
    %v399 = vpop.f32.mrb[0].mxu0
    %v400 = vadd.f32 0.0, %v399
    %v401 = vpop.f32.mrb[0].mxu0
    %v402 = vpop.f32.mrb[0].mxu0
    %v403 = vadd.f32 0.0, %v402
    %v404 = vpop.f32.mrb[0].mxu0
    %405 = vdwg.mxu0
    %v406 = vadd.f32 %v327, %v330
    %v407 = vadd.f32 %v406, %v333
    %v408 = vadd.f32 %v407, %v336
    %v409 = vsel %vm252, %v392, 0.0
    %v410 = vsel %vm252, %v395, 0.0
    %v411 = vadd.f32 %v409, %v410
    %v412 = vsel %vm252, %v400, 0.0
    %v413 = vadd.f32 %v411, %v412
    %v414 = vsel %vm252, %v403, 0.0
    %v415 = vadd.f32 %v413, %v414
    %v416 = vmul.f32 %v392, %v206
    %v417 = vmul.f32 %v395, %v207
    %v418 = vmul.f32 %v400, %v208
    %v419 = vmul.f32 %v403, %v209
    %v420 = vsel %vm252, %v416, 0.0
    %v421 = vsel %vm252, %v417, 0.0
    %v422 = vadd.f32 %v420, %v421
    %v423 = vsel %vm252, %v418, 0.0
    %v424 = vadd.f32 %v422, %v423
    %v425 = vsel %vm252, %v419, 0.0
    %v426 = vadd.f32 %v424, %v425
    %428 = vrot.lane.b32.xlu0 %v205, 120
    %v429 = vpop.permute.xlu0 %428
    %v431 = vmul.f32 %v426, %v429
    %433 = vrot.lane.b32.xlu0 %v431, 8
    %v434 = vpop.permute.xlu0 %433
    %v436 = vsel %vm252, %v415, %v434
    %v437 = vmul.f32 %v436, -0.25
    %439 = vrot.lane.b32.xlu0 %v437, 16
    %v440 = vpop.permute.xlu0 %439
    %v442 = vsel %vm50, %v21, %v440
    %v443 = vpack.c.bf16 %v442, %v442
    %v445 = vsel %vm324, %v443, 0
    %447 = vmatprep.subr.bf16.mxu0 0
    %448 = vmatpush1.bf16.msra.mxu0 %v36
    %449 = vmatprep.subr.bf16.mxu0 0
    %450 = vmatpush1.bf16.msra.mxu0 %v37
    %451 = vmatprep.subr.bf16.mxu0 0
    %452 = vmatpush1.bf16.msra.mxu0 0
    %453 = vmatprep.subr.bf16.mxu0 0
    %454 = vmatpush1.bf16.msra.mxu0 0
    %455 = vmatprep.subr.bf16.mxu0 0
    %456 = vmatpush1.bf16.msra.mxu0 0
    %457 = vmatprep.subr.bf16.mxu0 0
    %458 = vmatpush1.bf16.msra.mxu0 0
    %459 = vmatprep.subr.bf16.mxu0 0
    %460 = vmatpush1.bf16.msra.mxu0 0
    %461 = vmatprep.subr.bf16.mxu0 0
    %462 = vmatpush1.bf16.msra.mxu0 0
    %463 = vmatprep.subr.bf16.mxu0 0
    %464 = vmatpush1.bf16.msra.mxu0 0
    %465 = vmatprep.subr.bf16.mxu0 0
    %466 = vmatpush1.bf16.msra.mxu0 0
    %467 = vmatprep.subr.bf16.mxu0 0
    %468 = vmatpush1.bf16.msra.mxu0 0
    %469 = vmatprep.subr.bf16.mxu0 0
    %470 = vmatpush1.bf16.msra.mxu0 0
    %471 = vmatprep.subr.bf16.mxu0 0
    %472 = vmatpush1.bf16.msra.mxu0 0
    %473 = vmatprep.subr.bf16.mxu0 0
    %474 = vmatpush1.bf16.msra.mxu0 0
    %475 = vmatprep.subr.bf16.mxu0 0
    %476 = vmatpush1.bf16.msra.mxu0 0
    %477 = vmatprep.subr.bf16.mxu0 0
    %478 = vmatpush1.bf16.msra.mxu0 0
    %479 = vmatprep.mubr.bf16.mxu0 0
    %480 = vmatmul.mubr.bf16.gmra.mrb[0].mxu0 %v445
    %v481 = vpop.f32.mrb[0].mxu0
    %v482 = vadd.f32 %v197, %v481
    %v483 = vpop.f32.mrb[0].mxu0
    %v484 = vpop.f32.mrb[0].mxu0
    %v485 = vpop.f32.mrb[0].mxu0
    %486 = vdwg.mxu0
    %v487 = vtanh.pop %v482
    %v488 = vpack.c.bf16 %v487, %v487
    %v490 = vsel %vm324, %v488, 0
    %492 = vmatprep.subr.bf16.mxu0 0
    %493 = vmatpush1.bf16.msra.mxu0 %v42
    %494 = vmatprep.subr.bf16.mxu0 0
    %495 = vmatpush1.bf16.msra.mxu0 %v43
    %496 = vmatprep.subr.bf16.mxu0 0
    %497 = vmatpush1.bf16.msra.mxu0 0
    %498 = vmatprep.subr.bf16.mxu0 0
    %499 = vmatpush1.bf16.msra.mxu0 0
    %500 = vmatprep.subr.bf16.mxu0 0
    %501 = vmatpush1.bf16.msra.mxu0 0
    %502 = vmatprep.subr.bf16.mxu0 0
    %503 = vmatpush1.bf16.msra.mxu0 0
    %504 = vmatprep.subr.bf16.mxu0 0
    %505 = vmatpush1.bf16.msra.mxu0 0
    %506 = vmatprep.subr.bf16.mxu0 0
    %507 = vmatpush1.bf16.msra.mxu0 0
    %508 = vmatprep.subr.bf16.mxu0 0
    %509 = vmatpush1.bf16.msra.mxu0 0
    %510 = vmatprep.subr.bf16.mxu0 0
    %511 = vmatpush1.bf16.msra.mxu0 0
    %512 = vmatprep.subr.bf16.mxu0 0
    %513 = vmatpush1.bf16.msra.mxu0 0
    %514 = vmatprep.subr.bf16.mxu0 0
    %515 = vmatpush1.bf16.msra.mxu0 0
    %516 = vmatprep.subr.bf16.mxu0 0
    %517 = vmatpush1.bf16.msra.mxu0 0
    %518 = vmatprep.subr.bf16.mxu0 0
    %519 = vmatpush1.bf16.msra.mxu0 0
    %520 = vmatprep.subr.bf16.mxu0 0
    %521 = vmatpush1.bf16.msra.mxu0 0
    %522 = vmatprep.subr.bf16.mxu0 0
    %523 = vmatpush1.bf16.msra.mxu0 0
    %524 = vmatprep.mubr.bf16.mxu0 0
    %525 = vmatmul.mubr.bf16.gmra.mrb[0].mxu0 %v490
    %v526 = vpop.f32.mrb[0].mxu0
    %v527 = vadd.f32 0.0, %v526
    %v528 = vpop.f32.mrb[0].mxu0
    %v529 = vpop.f32.mrb[0].mxu0
    %v530 = vpop.f32.mrb[0].mxu0
    %531 = vdwg.mxu0
    %v532 = vadd.f32 %v21, %v527
    %v533 = vlaneseq
    %v534 = vshrl.u32 %v533, 7
    %v535 = vsub.s32 3, %v534
    %v536 = vrot.slane %v23, %v535
    %v537 = vadd.f32 %v532, %v536
    %v538 = vmul.f32 %v537, 1.442695
    %v539 = vpow.pop %v538
    %s540 = scalar_lea.vmem %s3, 32
    %v541 = vld [vmem:[%s540] sm:$0xff]
    %v542 = vld [vmem:[%s540 + $0x8] sm:$0xff]
    %v543 = vld [vmem:[%s540 + $0x10] sm:$0xff]
    %v544 = vld [vmem:[%s540 + $0x18] sm:$0xff]
    %549 = vrot.lane.b32.xlu0 %v541, 8
    %v550 = vpop.permute.xlu0 %549
    %551 = vrot.lane.b32.xlu0 %v542, 8
    %v552 = vpop.permute.xlu0 %551
    %553 = vrot.lane.b32.xlu0 %v543, 8
    %v554 = vpop.permute.xlu0 %553
    %555 = vrot.lane.b32.xlu0 %v544, 8
    %v556 = vpop.permute.xlu0 %555
    %v561 = vmul.f32 %v539, %v550
    %v562 = vmul.f32 %v539, %v552
    %v563 = vmul.f32 %v539, %v554
    %v564 = vmul.f32 %v539, %v556
    %569 = vrot.lane.b32.xlu0 %v561, 120
    %v570 = vpop.permute.xlu0 %569
    %571 = vrot.lane.b32.xlu0 %v562, 120
    %v572 = vpop.permute.xlu0 %571
    %573 = vrot.lane.b32.xlu0 %v563, 120
    %v574 = vpop.permute.xlu0 %573
    %575 = vrot.lane.b32.xlu0 %v564, 120
    %v576 = vpop.permute.xlu0 %575
    %v581 = vadd.f32 %v537, %v570
    %v582 = vadd.f32 %v537, %v572
    %v583 = vadd.f32 %v537, %v574
    %v584 = vadd.f32 %v537, %v576
    %v585 = vpack.c.bf16 %v582, %v581
    %v586 = vpack.c.bf16 %v584, %v583
    %v588 = vsel %vm252, %v585, 0
    %v591 = vsel %vm252, %v586, 0
    %593 = vmatprep.subr.bf16.mxu0 0
    %594 = vmatpush1.bf16.msra.mxu0 %v261
    %595 = vmatprep.subr.bf16.mxu0 0
    %596 = vmatpush1.bf16.msra.mxu0 0
    %597 = vmatprep.subr.bf16.mxu0 0
    %598 = vmatpush1.bf16.msra.mxu0 0
    %599 = vmatprep.subr.bf16.mxu0 0
    %600 = vmatpush1.bf16.msra.mxu0 0
    %601 = vmatprep.subr.bf16.mxu0 0
    %602 = vmatpush1.bf16.msra.mxu0 0
    %603 = vmatprep.subr.bf16.mxu0 0
    %604 = vmatpush1.bf16.msra.mxu0 0
    %605 = vmatprep.subr.bf16.mxu0 0
    %606 = vmatpush1.bf16.msra.mxu0 0
    %607 = vmatprep.subr.bf16.mxu0 0
    %608 = vmatpush1.bf16.msra.mxu0 0
    %609 = vmatprep.subr.bf16.mxu0 0
    %610 = vmatpush1.bf16.msra.mxu0 0
    %611 = vmatprep.subr.bf16.mxu0 0
    %612 = vmatpush1.bf16.msra.mxu0 0
    %613 = vmatprep.subr.bf16.mxu0 0
    %614 = vmatpush1.bf16.msra.mxu0 0
    %615 = vmatprep.subr.bf16.mxu0 0
    %616 = vmatpush1.bf16.msra.mxu0 0
    %617 = vmatprep.subr.bf16.mxu0 0
    %618 = vmatpush1.bf16.msra.mxu0 0
    %619 = vmatprep.subr.bf16.mxu0 0
    %620 = vmatpush1.bf16.msra.mxu0 0
    %621 = vmatprep.subr.bf16.mxu0 0
    %622 = vmatpush1.bf16.msra.mxu0 0
    %623 = vmatprep.subr.bf16.mxu0 0
    %624 = vmatpush1.bf16.msra.mxu0 0
    %625 = vmatprep.mubr.bf16.mxu0 0
    %626 = vmatmul.mubr.bf16.gmra.mrb[0].mxu0 %v588
    %v627 = vpop.f32.mrb[0].mxu0
    %v628 = vadd.f32 0.0, %v627
    %v629 = vpop.f32.mrb[0].mxu0
    %v630 = vpop.f32.mrb[0].mxu0
    %v631 = vadd.f32 0.0, %v630
    %v632 = vpop.f32.mrb[0].mxu0
    %633 = vmatprep.mubr.bf16.mxu0 0
    %634 = vmatmul.mubr.bf16.gmra.mrb[0].mxu0 %v591
    %v635 = vpop.f32.mrb[0].mxu0
    %v636 = vadd.f32 0.0, %v635
    %v637 = vpop.f32.mrb[0].mxu0
    %v638 = vpop.f32.mrb[0].mxu0
    %v639 = vadd.f32 0.0, %v638
    %v640 = vpop.f32.mrb[0].mxu0
    %641 = vdwg.mxu0
    %v642 = vadd.f32 %v121, %v628
    %v643 = vadd.f32 %v121, %v631
    %v644 = vadd.f32 %v121, %v636
    %v645 = vadd.f32 %v121, %v639
    %v646 = vtanh.pop %v642
    %v647 = vtanh.pop %v643
    %v648 = vtanh.pop %v644
    %v649 = vtanh.pop %v645
    %v650 = vmul.f32 %v646, %v203
    %v651 = vmul.f32 %v647, %v203
    %v652 = vmul.f32 %v648, %v203
    %v653 = vmul.f32 %v649, %v203
    %v654 = vsel %vm324, %v650, 0.0
    %655 = vadd.xlane.f32.xlu0 %v654
    %v656 = vpop.xlane.xlu0 %655
    %v657 = vsel %vm324, %v651, 0.0
    %658 = vadd.xlane.f32.xlu0 %v657
    %v659 = vpop.xlane.xlu0 %658
    %v660 = vsel %vm324, %v652, 0.0
    %661 = vadd.xlane.f32.xlu0 %v660
    %v662 = vpop.xlane.xlu0 %661
    %v663 = vsel %vm324, %v653, 0.0
    %664 = vadd.xlane.f32.xlu0 %v663
    %v665 = vpop.xlane.xlu0 %664
    %v666 = vmul.f32 %v646, %v646
    %v667 = vmul.f32 %v647, %v647
    %v668 = vmul.f32 %v648, %v648
    %v669 = vmul.f32 %v649, %v649
    %v670 = vsub.f32 1.0, %v666
    %v671 = vsub.f32 1.0, %v667
    %v672 = vsub.f32 1.0, %v668
    %v673 = vsub.f32 1.0, %v669
    %v674 = vmul.f32 %v670, %v203
    %v675 = vmul.f32 %v671, %v203
    %v676 = vmul.f32 %v672, %v203
    %v677 = vmul.f32 %v673, %v203
    %v678 = vpack.c.bf16 %v675, %v674
    %v679 = vpack.c.bf16 %v677, %v676
    %v681 = vsel %vm324, %v678, 0
    %v684 = vsel %vm324, %v679, 0
    %686 = vmatprep.subr.bf16.mxu0 0
    %687 = vmatpush1.bf16.msra.mxu0 %v30
    %688 = vmatprep.subr.bf16.mxu0 0
    %689 = vmatpush1.bf16.msra.mxu0 %v31
    %690 = vmatprep.subr.bf16.mxu0 0
    %691 = vmatpush1.bf16.msra.mxu0 0
    %692 = vmatprep.subr.bf16.mxu0 0
    %693 = vmatpush1.bf16.msra.mxu0 0
    %694 = vmatprep.subr.bf16.mxu0 0
    %695 = vmatpush1.bf16.msra.mxu0 0
    %696 = vmatprep.subr.bf16.mxu0 0
    %697 = vmatpush1.bf16.msra.mxu0 0
    %698 = vmatprep.subr.bf16.mxu0 0
    %699 = vmatpush1.bf16.msra.mxu0 0
    %700 = vmatprep.subr.bf16.mxu0 0
    %701 = vmatpush1.bf16.msra.mxu0 0
    %702 = vmatprep.subr.bf16.mxu0 0
    %703 = vmatpush1.bf16.msra.mxu0 0
    %704 = vmatprep.subr.bf16.mxu0 0
    %705 = vmatpush1.bf16.msra.mxu0 0
    %706 = vmatprep.subr.bf16.mxu0 0
    %707 = vmatpush1.bf16.msra.mxu0 0
    %708 = vmatprep.subr.bf16.mxu0 0
    %709 = vmatpush1.bf16.msra.mxu0 0
    %710 = vmatprep.subr.bf16.mxu0 0
    %711 = vmatpush1.bf16.msra.mxu0 0
    %712 = vmatprep.subr.bf16.mxu0 0
    %713 = vmatpush1.bf16.msra.mxu0 0
    %714 = vmatprep.subr.bf16.mxu0 0
    %715 = vmatpush1.bf16.msra.mxu0 0
    %716 = vmatprep.subr.bf16.mxu0 0
    %717 = vmatpush1.bf16.msra.mxu0 0
    %718 = vmatprep.mubr.bf16.mxu0 0
    %719 = vmatmul.mubr.bf16.gmra.mrb[0].mxu0 %v681
    %v720 = vpop.f32.mrb[0].mxu0
    %v721 = vadd.f32 0.0, %v720
    %v722 = vpop.f32.mrb[0].mxu0
    %v723 = vpop.f32.mrb[0].mxu0
    %v724 = vadd.f32 0.0, %v723
    %v725 = vpop.f32.mrb[0].mxu0
    %726 = vmatprep.mubr.bf16.mxu0 0
    %727 = vmatmul.mubr.bf16.gmra.mrb[0].mxu0 %v684
    %v728 = vpop.f32.mrb[0].mxu0
    %v729 = vadd.f32 0.0, %v728
    %v730 = vpop.f32.mrb[0].mxu0
    %v731 = vpop.f32.mrb[0].mxu0
    %v732 = vadd.f32 0.0, %v731
    %v733 = vpop.f32.mrb[0].mxu0
    %734 = vdwg.mxu0
    %v735 = vadd.f32 %v656, %v659
    %v736 = vadd.f32 %v735, %v662
    %v737 = vadd.f32 %v736, %v665
    %v738 = vsel %vm252, %v721, 0.0
    %v739 = vsel %vm252, %v724, 0.0
    %v740 = vadd.f32 %v738, %v739
    %v741 = vsel %vm252, %v729, 0.0
    %v742 = vadd.f32 %v740, %v741
    %v743 = vsel %vm252, %v732, 0.0
    %v744 = vadd.f32 %v742, %v743
    %v745 = vmul.f32 %v721, %v541
    %v746 = vmul.f32 %v724, %v542
    %v747 = vmul.f32 %v729, %v543
    %v748 = vmul.f32 %v732, %v544
    %v749 = vsel %vm252, %v745, 0.0
    %v750 = vsel %vm252, %v746, 0.0
    %v751 = vadd.f32 %v749, %v750
    %v752 = vsel %vm252, %v747, 0.0
    %v753 = vadd.f32 %v751, %v752
    %v754 = vsel %vm252, %v748, 0.0
    %v755 = vadd.f32 %v753, %v754
    %757 = vrot.lane.b32.xlu0 %v539, 120
    %v758 = vpop.permute.xlu0 %757
    %v760 = vmul.f32 %v755, %v758
    %762 = vrot.lane.b32.xlu0 %v760, 8
    %v763 = vpop.permute.xlu0 %762
    %v765 = vsel %vm252, %v744, %v763
    %v766 = vmul.f32 %v765, -0.25
    %768 = vrot.lane.b32.xlu0 %v766, 16
    %v769 = vpop.permute.xlu0 %768
    %v771 = vsel %vm50, %v537, %v769
    %v772 = vpack.c.bf16 %v771, %v771
    %v774 = vsel %vm324, %v772, 0
    %776 = vmatprep.subr.bf16.mxu0 0
    %777 = vmatpush1.bf16.msra.mxu0 %v36
    %778 = vmatprep.subr.bf16.mxu0 0
    %779 = vmatpush1.bf16.msra.mxu0 %v37
    %780 = vmatprep.subr.bf16.mxu0 0
    %781 = vmatpush1.bf16.msra.mxu0 0
    %782 = vmatprep.subr.bf16.mxu0 0
    %783 = vmatpush1.bf16.msra.mxu0 0
    %784 = vmatprep.subr.bf16.mxu0 0
    %785 = vmatpush1.bf16.msra.mxu0 0
    %786 = vmatprep.subr.bf16.mxu0 0
    %787 = vmatpush1.bf16.msra.mxu0 0
    %788 = vmatprep.subr.bf16.mxu0 0
    %789 = vmatpush1.bf16.msra.mxu0 0
    %790 = vmatprep.subr.bf16.mxu0 0
    %791 = vmatpush1.bf16.msra.mxu0 0
    %792 = vmatprep.subr.bf16.mxu0 0
    %793 = vmatpush1.bf16.msra.mxu0 0
    %794 = vmatprep.subr.bf16.mxu0 0
    %795 = vmatpush1.bf16.msra.mxu0 0
    %796 = vmatprep.subr.bf16.mxu0 0
    %797 = vmatpush1.bf16.msra.mxu0 0
    %798 = vmatprep.subr.bf16.mxu0 0
    %799 = vmatpush1.bf16.msra.mxu0 0
    %800 = vmatprep.subr.bf16.mxu0 0
    %801 = vmatpush1.bf16.msra.mxu0 0
    %802 = vmatprep.subr.bf16.mxu0 0
    %803 = vmatpush1.bf16.msra.mxu0 0
    %804 = vmatprep.subr.bf16.mxu0 0
    %805 = vmatpush1.bf16.msra.mxu0 0
    %806 = vmatprep.subr.bf16.mxu0 0
    %807 = vmatpush1.bf16.msra.mxu0 0
    %808 = vmatprep.mubr.bf16.mxu0 0
    %809 = vmatmul.mubr.bf16.gmra.mrb[0].mxu0 %v774
    %v810 = vpop.f32.mrb[0].mxu0
    %v811 = vadd.f32 %v197, %v810
    %v812 = vpop.f32.mrb[0].mxu0
    %v813 = vpop.f32.mrb[0].mxu0
    %v814 = vpop.f32.mrb[0].mxu0
    %815 = vdwg.mxu0
    %v816 = vtanh.pop %v811
    %v817 = vpack.c.bf16 %v816, %v816
    %v819 = vsel %vm324, %v817, 0
    %821 = vmatprep.subr.bf16.mxu0 0
    %822 = vmatpush1.bf16.msra.mxu0 %v42
    %823 = vmatprep.subr.bf16.mxu0 0
    %824 = vmatpush1.bf16.msra.mxu0 %v43
    %825 = vmatprep.subr.bf16.mxu0 0
    %826 = vmatpush1.bf16.msra.mxu0 0
    %827 = vmatprep.subr.bf16.mxu0 0
    %828 = vmatpush1.bf16.msra.mxu0 0
    %829 = vmatprep.subr.bf16.mxu0 0
    %830 = vmatpush1.bf16.msra.mxu0 0
    %831 = vmatprep.subr.bf16.mxu0 0
    %832 = vmatpush1.bf16.msra.mxu0 0
    %833 = vmatprep.subr.bf16.mxu0 0
    %834 = vmatpush1.bf16.msra.mxu0 0
    %835 = vmatprep.subr.bf16.mxu0 0
    %836 = vmatpush1.bf16.msra.mxu0 0
    %837 = vmatprep.subr.bf16.mxu0 0
    %838 = vmatpush1.bf16.msra.mxu0 0
    %839 = vmatprep.subr.bf16.mxu0 0
    %840 = vmatpush1.bf16.msra.mxu0 0
    %841 = vmatprep.subr.bf16.mxu0 0
    %842 = vmatpush1.bf16.msra.mxu0 0
    %843 = vmatprep.subr.bf16.mxu0 0
    %844 = vmatpush1.bf16.msra.mxu0 0
    %845 = vmatprep.subr.bf16.mxu0 0
    %846 = vmatpush1.bf16.msra.mxu0 0
    %847 = vmatprep.subr.bf16.mxu0 0
    %848 = vmatpush1.bf16.msra.mxu0 0
    %849 = vmatprep.subr.bf16.mxu0 0
    %850 = vmatpush1.bf16.msra.mxu0 0
    %851 = vmatprep.subr.bf16.mxu0 0
    %852 = vmatpush1.bf16.msra.mxu0 0
    %853 = vmatprep.mubr.bf16.mxu0 0
    %854 = vmatmul.mubr.bf16.gmra.mrb[0].mxu0 %v819
    %v855 = vpop.f32.mrb[0].mxu0
    %v856 = vadd.f32 0.0, %v855
    %v857 = vpop.f32.mrb[0].mxu0
    %v858 = vpop.f32.mrb[0].mxu0
    %v859 = vpop.f32.mrb[0].mxu0
    %860 = vdwg.mxu0
    %v861 = vadd.f32 %v537, %v856
    %v862 = vadd.f32 %v861, %v536
    %v863 = vmul.f32 %v862, 1.442695
    %v864 = vpow.pop %v863
    %s865 = scalar_lea.vmem %s3, 64
    %v866 = vld [vmem:[%s865] sm:$0xff]
    %v867 = vld [vmem:[%s865 + $0x8] sm:$0xff]
    %v868 = vld [vmem:[%s865 + $0x10] sm:$0xff]
    %v869 = vld [vmem:[%s865 + $0x18] sm:$0xff]
    %874 = vrot.lane.b32.xlu0 %v866, 8
    %v875 = vpop.permute.xlu0 %874
    %876 = vrot.lane.b32.xlu0 %v867, 8
    %v877 = vpop.permute.xlu0 %876
    %878 = vrot.lane.b32.xlu0 %v868, 8
    %v879 = vpop.permute.xlu0 %878
    %880 = vrot.lane.b32.xlu0 %v869, 8
    %v881 = vpop.permute.xlu0 %880
    %v886 = vmul.f32 %v864, %v875
    %v887 = vmul.f32 %v864, %v877
    %v888 = vmul.f32 %v864, %v879
    %v889 = vmul.f32 %v864, %v881
    %894 = vrot.lane.b32.xlu0 %v886, 120
    %v895 = vpop.permute.xlu0 %894
    %896 = vrot.lane.b32.xlu0 %v887, 120
    %v897 = vpop.permute.xlu0 %896
    %898 = vrot.lane.b32.xlu0 %v888, 120
    %v899 = vpop.permute.xlu0 %898
    %900 = vrot.lane.b32.xlu0 %v889, 120
    %v901 = vpop.permute.xlu0 %900
    %v906 = vadd.f32 %v862, %v895
    %v907 = vadd.f32 %v862, %v897
    %v908 = vadd.f32 %v862, %v899
    %v909 = vadd.f32 %v862, %v901
    %v910 = vpack.c.bf16 %v907, %v906
    %v911 = vpack.c.bf16 %v909, %v908
    %v913 = vsel %vm252, %v910, 0
    %v916 = vsel %vm252, %v911, 0
    %918 = vmatprep.subr.bf16.mxu0 0
    %919 = vmatpush1.bf16.msra.mxu0 %v261
    %920 = vmatprep.subr.bf16.mxu0 0
    %921 = vmatpush1.bf16.msra.mxu0 0
    %922 = vmatprep.subr.bf16.mxu0 0
    %923 = vmatpush1.bf16.msra.mxu0 0
    %924 = vmatprep.subr.bf16.mxu0 0
    %925 = vmatpush1.bf16.msra.mxu0 0
    %926 = vmatprep.subr.bf16.mxu0 0
    %927 = vmatpush1.bf16.msra.mxu0 0
    %928 = vmatprep.subr.bf16.mxu0 0
    %929 = vmatpush1.bf16.msra.mxu0 0
    %930 = vmatprep.subr.bf16.mxu0 0
    %931 = vmatpush1.bf16.msra.mxu0 0
    %932 = vmatprep.subr.bf16.mxu0 0
    %933 = vmatpush1.bf16.msra.mxu0 0
    %934 = vmatprep.subr.bf16.mxu0 0
    %935 = vmatpush1.bf16.msra.mxu0 0
    %936 = vmatprep.subr.bf16.mxu0 0
    %937 = vmatpush1.bf16.msra.mxu0 0
    %938 = vmatprep.subr.bf16.mxu0 0
    %939 = vmatpush1.bf16.msra.mxu0 0
    %940 = vmatprep.subr.bf16.mxu0 0
    %941 = vmatpush1.bf16.msra.mxu0 0
    %942 = vmatprep.subr.bf16.mxu0 0
    %943 = vmatpush1.bf16.msra.mxu0 0
    %944 = vmatprep.subr.bf16.mxu0 0
    %945 = vmatpush1.bf16.msra.mxu0 0
    %946 = vmatprep.subr.bf16.mxu0 0
    %947 = vmatpush1.bf16.msra.mxu0 0
    %948 = vmatprep.subr.bf16.mxu0 0
    %949 = vmatpush1.bf16.msra.mxu0 0
    %950 = vmatprep.mubr.bf16.mxu0 0
    %951 = vmatmul.mubr.bf16.gmra.mrb[0].mxu0 %v913
    %v952 = vpop.f32.mrb[0].mxu0
    %v953 = vadd.f32 0.0, %v952
    %v954 = vpop.f32.mrb[0].mxu0
    %v955 = vpop.f32.mrb[0].mxu0
    %v956 = vadd.f32 0.0, %v955
    %v957 = vpop.f32.mrb[0].mxu0
    %958 = vmatprep.mubr.bf16.mxu0 0
    %959 = vmatmul.mubr.bf16.gmra.mrb[0].mxu0 %v916
    %v960 = vpop.f32.mrb[0].mxu0
    %v961 = vadd.f32 0.0, %v960
    %v962 = vpop.f32.mrb[0].mxu0
    %v963 = vpop.f32.mrb[0].mxu0
    %v964 = vadd.f32 0.0, %v963
    %v965 = vpop.f32.mrb[0].mxu0
    %966 = vdwg.mxu0
    %v967 = vadd.f32 %v121, %v953
    %v968 = vadd.f32 %v121, %v956
    %v969 = vadd.f32 %v121, %v961
    %v970 = vadd.f32 %v121, %v964
    %v971 = vtanh.pop %v967
    %v972 = vtanh.pop %v968
    %v973 = vtanh.pop %v969
    %v974 = vtanh.pop %v970
    %v975 = vmul.f32 %v971, %v203
    %v976 = vmul.f32 %v972, %v203
    %v977 = vmul.f32 %v973, %v203
    %v978 = vmul.f32 %v974, %v203
    %v979 = vsel %vm324, %v975, 0.0
    %980 = vadd.xlane.f32.xlu0 %v979
    %v981 = vpop.xlane.xlu0 %980
    %v982 = vsel %vm324, %v976, 0.0
    %983 = vadd.xlane.f32.xlu0 %v982
    %v984 = vpop.xlane.xlu0 %983
    %v985 = vsel %vm324, %v977, 0.0
    %986 = vadd.xlane.f32.xlu0 %v985
    %v987 = vpop.xlane.xlu0 %986
    %v988 = vsel %vm324, %v978, 0.0
    %989 = vadd.xlane.f32.xlu0 %v988
    %v990 = vpop.xlane.xlu0 %989
    %v991 = vmul.f32 %v971, %v971
    %v992 = vmul.f32 %v972, %v972
    %v993 = vmul.f32 %v973, %v973
    %v994 = vmul.f32 %v974, %v974
    %v995 = vsub.f32 1.0, %v991
    %v996 = vsub.f32 1.0, %v992
    %v997 = vsub.f32 1.0, %v993
    %v998 = vsub.f32 1.0, %v994
    %v999 = vmul.f32 %v995, %v203
    %v1000 = vmul.f32 %v996, %v203
    %v1001 = vmul.f32 %v997, %v203
    %v1002 = vmul.f32 %v998, %v203
    %v1003 = vpack.c.bf16 %v1000, %v999
    %v1004 = vpack.c.bf16 %v1002, %v1001
    %v1006 = vsel %vm324, %v1003, 0
    %v1009 = vsel %vm324, %v1004, 0
    %1011 = vmatprep.subr.bf16.mxu0 0
    %1012 = vmatpush1.bf16.msra.mxu0 %v30
    %1013 = vmatprep.subr.bf16.mxu0 0
    %1014 = vmatpush1.bf16.msra.mxu0 %v31
    %1015 = vmatprep.subr.bf16.mxu0 0
    %1016 = vmatpush1.bf16.msra.mxu0 0
    %1017 = vmatprep.subr.bf16.mxu0 0
    %1018 = vmatpush1.bf16.msra.mxu0 0
    %1019 = vmatprep.subr.bf16.mxu0 0
    %1020 = vmatpush1.bf16.msra.mxu0 0
    %1021 = vmatprep.subr.bf16.mxu0 0
    %1022 = vmatpush1.bf16.msra.mxu0 0
    %1023 = vmatprep.subr.bf16.mxu0 0
    %1024 = vmatpush1.bf16.msra.mxu0 0
    %1025 = vmatprep.subr.bf16.mxu0 0
    %1026 = vmatpush1.bf16.msra.mxu0 0
    %1027 = vmatprep.subr.bf16.mxu0 0
    %1028 = vmatpush1.bf16.msra.mxu0 0
    %1029 = vmatprep.subr.bf16.mxu0 0
    %1030 = vmatpush1.bf16.msra.mxu0 0
    %1031 = vmatprep.subr.bf16.mxu0 0
    %1032 = vmatpush1.bf16.msra.mxu0 0
    %1033 = vmatprep.subr.bf16.mxu0 0
    %1034 = vmatpush1.bf16.msra.mxu0 0
    %1035 = vmatprep.subr.bf16.mxu0 0
    %1036 = vmatpush1.bf16.msra.mxu0 0
    %1037 = vmatprep.subr.bf16.mxu0 0
    %1038 = vmatpush1.bf16.msra.mxu0 0
    %1039 = vmatprep.subr.bf16.mxu0 0
    %1040 = vmatpush1.bf16.msra.mxu0 0
    %1041 = vmatprep.subr.bf16.mxu0 0
    %1042 = vmatpush1.bf16.msra.mxu0 0
    %1043 = vmatprep.mubr.bf16.mxu0 0
    %1044 = vmatmul.mubr.bf16.gmra.mrb[0].mxu0 %v1006
    %v1045 = vpop.f32.mrb[0].mxu0
    %v1046 = vadd.f32 0.0, %v1045
    %v1047 = vpop.f32.mrb[0].mxu0
    %v1048 = vpop.f32.mrb[0].mxu0
    %v1049 = vadd.f32 0.0, %v1048
    %v1050 = vpop.f32.mrb[0].mxu0
    %1051 = vmatprep.mubr.bf16.mxu0 0
    %1052 = vmatmul.mubr.bf16.gmra.mrb[0].mxu0 %v1009
    %v1053 = vpop.f32.mrb[0].mxu0
    %v1054 = vadd.f32 0.0, %v1053
    %v1055 = vpop.f32.mrb[0].mxu0
    %v1056 = vpop.f32.mrb[0].mxu0
    %v1057 = vadd.f32 0.0, %v1056
    %v1058 = vpop.f32.mrb[0].mxu0
    %1059 = vdwg.mxu0
    %v1060 = vadd.f32 %v981, %v984
    %v1061 = vadd.f32 %v1060, %v987
    %v1062 = vadd.f32 %v1061, %v990
    %v1063 = vsel %vm252, %v1046, 0.0
    %v1064 = vsel %vm252, %v1049, 0.0
    %v1065 = vadd.f32 %v1063, %v1064
    %v1066 = vsel %vm252, %v1054, 0.0
    %v1067 = vadd.f32 %v1065, %v1066
    %v1068 = vsel %vm252, %v1057, 0.0
    %v1069 = vadd.f32 %v1067, %v1068
    %v1070 = vmul.f32 %v1046, %v866
    %v1071 = vmul.f32 %v1049, %v867
    %v1072 = vmul.f32 %v1054, %v868
    %v1073 = vmul.f32 %v1057, %v869
    %v1074 = vsel %vm252, %v1070, 0.0
    %v1075 = vsel %vm252, %v1071, 0.0
    %v1076 = vadd.f32 %v1074, %v1075
    %v1077 = vsel %vm252, %v1072, 0.0
    %v1078 = vadd.f32 %v1076, %v1077
    %v1079 = vsel %vm252, %v1073, 0.0
    %v1080 = vadd.f32 %v1078, %v1079
    %1082 = vrot.lane.b32.xlu0 %v864, 120
    %v1083 = vpop.permute.xlu0 %1082
    %v1085 = vmul.f32 %v1080, %v1083
    %1087 = vrot.lane.b32.xlu0 %v1085, 8
    %v1088 = vpop.permute.xlu0 %1087
    %v1090 = vsel %vm252, %v1069, %v1088
    %v1091 = vmul.f32 %v1090, -0.25
    %1093 = vrot.lane.b32.xlu0 %v1091, 16
    %v1094 = vpop.permute.xlu0 %1093
    %v1096 = vsel %vm50, %v862, %v1094
    %v1097 = vpack.c.bf16 %v1096, %v1096
    %v1099 = vsel %vm324, %v1097, 0
    %1101 = vmatprep.subr.bf16.mxu0 0
    %1102 = vmatpush1.bf16.msra.mxu0 %v36
    %1103 = vmatprep.subr.bf16.mxu0 0
    %1104 = vmatpush1.bf16.msra.mxu0 %v37
    %1105 = vmatprep.subr.bf16.mxu0 0
    %1106 = vmatpush1.bf16.msra.mxu0 0
    %1107 = vmatprep.subr.bf16.mxu0 0
    %1108 = vmatpush1.bf16.msra.mxu0 0
    %1109 = vmatprep.subr.bf16.mxu0 0
    %1110 = vmatpush1.bf16.msra.mxu0 0
    %1111 = vmatprep.subr.bf16.mxu0 0
    %1112 = vmatpush1.bf16.msra.mxu0 0
    %1113 = vmatprep.subr.bf16.mxu0 0
    %1114 = vmatpush1.bf16.msra.mxu0 0
    %1115 = vmatprep.subr.bf16.mxu0 0
    %1116 = vmatpush1.bf16.msra.mxu0 0
    %1117 = vmatprep.subr.bf16.mxu0 0
    %1118 = vmatpush1.bf16.msra.mxu0 0
    %1119 = vmatprep.subr.bf16.mxu0 0
    %1120 = vmatpush1.bf16.msra.mxu0 0
    %1121 = vmatprep.subr.bf16.mxu0 0
    %1122 = vmatpush1.bf16.msra.mxu0 0
    %1123 = vmatprep.subr.bf16.mxu0 0
    %1124 = vmatpush1.bf16.msra.mxu0 0
    %1125 = vmatprep.subr.bf16.mxu0 0
    %1126 = vmatpush1.bf16.msra.mxu0 0
    %1127 = vmatprep.subr.bf16.mxu0 0
    %1128 = vmatpush1.bf16.msra.mxu0 0
    %1129 = vmatprep.subr.bf16.mxu0 0
    %1130 = vmatpush1.bf16.msra.mxu0 0
    %1131 = vmatprep.subr.bf16.mxu0 0
    %1132 = vmatpush1.bf16.msra.mxu0 0
    %1133 = vmatprep.mubr.bf16.mxu0 0
    %1134 = vmatmul.mubr.bf16.gmra.mrb[0].mxu0 %v1099
    %v1135 = vpop.f32.mrb[0].mxu0
    %v1136 = vadd.f32 %v197, %v1135
    %v1137 = vpop.f32.mrb[0].mxu0
    %v1138 = vpop.f32.mrb[0].mxu0
    %v1139 = vpop.f32.mrb[0].mxu0
    %1140 = vdwg.mxu0
    %v1141 = vtanh.pop %v1136
    %v1142 = vpack.c.bf16 %v1141, %v1141
    %v1144 = vsel %vm324, %v1142, 0
    %1146 = vmatprep.subr.bf16.mxu0 0
    %1147 = vmatpush1.bf16.msra.mxu0 %v42
    %1148 = vmatprep.subr.bf16.mxu0 0
    %1149 = vmatpush1.bf16.msra.mxu0 %v43
    %1150 = vmatprep.subr.bf16.mxu0 0
    %1151 = vmatpush1.bf16.msra.mxu0 0
    %1152 = vmatprep.subr.bf16.mxu0 0
    %1153 = vmatpush1.bf16.msra.mxu0 0
    %1154 = vmatprep.subr.bf16.mxu0 0
    %1155 = vmatpush1.bf16.msra.mxu0 0
    %1156 = vmatprep.subr.bf16.mxu0 0
    %1157 = vmatpush1.bf16.msra.mxu0 0
    %1158 = vmatprep.subr.bf16.mxu0 0
    %1159 = vmatpush1.bf16.msra.mxu0 0
    %1160 = vmatprep.subr.bf16.mxu0 0
    %1161 = vmatpush1.bf16.msra.mxu0 0
    %1162 = vmatprep.subr.bf16.mxu0 0
    %1163 = vmatpush1.bf16.msra.mxu0 0
    %1164 = vmatprep.subr.bf16.mxu0 0
    %1165 = vmatpush1.bf16.msra.mxu0 0
    %1166 = vmatprep.subr.bf16.mxu0 0
    %1167 = vmatpush1.bf16.msra.mxu0 0
    %1168 = vmatprep.subr.bf16.mxu0 0
    %1169 = vmatpush1.bf16.msra.mxu0 0
    %1170 = vmatprep.subr.bf16.mxu0 0
    %1171 = vmatpush1.bf16.msra.mxu0 0
    %1172 = vmatprep.subr.bf16.mxu0 0
    %1173 = vmatpush1.bf16.msra.mxu0 0
    %1174 = vmatprep.subr.bf16.mxu0 0
    %1175 = vmatpush1.bf16.msra.mxu0 0
    %1176 = vmatprep.subr.bf16.mxu0 0
    %1177 = vmatpush1.bf16.msra.mxu0 0
    %1178 = vmatprep.mubr.bf16.mxu0 0
    %1179 = vmatmul.mubr.bf16.gmra.mrb[0].mxu0 %v1144
    %v1180 = vpop.f32.mrb[0].mxu0
    %v1181 = vadd.f32 0.0, %v1180
    %v1182 = vpop.f32.mrb[0].mxu0
    %v1183 = vpop.f32.mrb[0].mxu0
    %v1184 = vpop.f32.mrb[0].mxu0
    %1185 = vdwg.mxu0
    %v1186 = vadd.f32 %v862, %v1181
    %v1187 = vadd.f32 %v1186, %v536
    %1188 = vst.msk [vmem:[#allocation2] sm:$0xff] %vm50, %v1187
    %vm1189 = vcmask 7168
    %v1190 = vsel %vm1189, %v408, %v737
    %vm1191 = vcmask 15360
    %v1192 = vsel %vm1191, %v1190, %v1062
    %v1193 = vmul.f32 %v1192, -0.25
    %v1195 = vrot.slane %v23, 4
    %s1196 = vtos %v1195
    %v1197 = vstv %s1196
    %v1199 = vsub.f32 %v1193, %v1197
    %vm1200 = vcmask 23552
    %1201 = vst.msk [vmem:[%s5] sm:$0xff] %vm1200, %v1199
    // Predicated region
    $region18: #{tpu_custom_call.1} parent=1 // pred_check
      _
    $region19: #{tpu_custom_call.1} parent=1 // pred_check_branch
      %1203 = sbr.rel (0) target = $region21
    $region20: #{tpu_custom_call.1} parent=1 // pred_region
      %s1205 = ssub.s32 128, 128
      %1206 = vsyncadd [#allocation3], %s1205
      %s1208 = sshll.u32 [#allocation2], 4
      %s1209 = int_to_ptr.vmem [resolvable:$true] %s1208
      %1211 = dma.vmem_to_hbm [thread:$0]  %s1209, 128, %s4, [#allocation3]
    $region21: #{tpu_custom_call.1} parent=1 // pred_fallthru
      _
    // Predicated region
    $region22: #{tpu_custom_call.1} parent=1 // pred_check
      _
    $region23: #{tpu_custom_call.1} parent=1 // pred_check_branch
      %1213 = sbr.rel (0) target = $region25
    $region24: #{tpu_custom_call.1} parent=1 // pred_region
      _
    $region25: #{tpu_custom_call.1} parent=1 // pred_fallthru
      _
    // Predicated region
    $region26: #{tpu_custom_call.1} parent=1 // pred_check
      _
    $region27: #{tpu_custom_call.1} parent=1 // pred_check_branch
      %1215 = sbr.rel (0) target = $region29
    $region28: #{tpu_custom_call.1} parent=1 // pred_region
      %1216 = dma.done [#allocation3], 128
    $region29: #{tpu_custom_call.1} parent=1 // pred_fallthru
      _
    // Predicated region
    $region30: #{tpu_custom_call.1} parent=1 // pred_check
      _
    $region31: #{tpu_custom_call.1} parent=1 // pred_check_branch
      %1218 = sbr.rel (0) target = $region33
    $region32: #{tpu_custom_call.1} parent=1 // pred_region
      _
    $region33: #{tpu_custom_call.1} parent=1 // pred_fallthru
      _
    %1219 = vsyncpa [#allocation3], 1

</llo_original>
